<compile_context>
chip_gen: v6e
topology: v6e:2x2x1
jax: 0.10.0
libtpu: 0.0.40
codegen_flags: <defaults>
</compile_context>

<pallas_src>
import functools

import jax
import jax.numpy as jnp
from jax.experimental import pallas as pl
from jax.experimental.pallas import tpu as pltpu


def _round_up(x, m):
    return ((x + m - 1) // m) * m


# ----------------------------------------------------------------------------
# Pallas kernels
# ----------------------------------------------------------------------------
def _conv_relu_pool_kernel(p_ref, w_ref, b_ref, o_ref, *, pool):
    """Fused conv-as-matmul + bias + ReLU + 2x2 pooling on one lane tile.

    p_ref: (4, K, TM) bf16  -- im2col patches; leading axis = 2x2 pooling tap
    w_ref: (Cout, K) bf16   -- PyTorch conv weight reshaped (Cout, Cin*Kh*Kw)
    b_ref: (Cout, 1) f32
    o_ref: (Cout, TM) bf16  -- pooled activations (lane-dense store)
    """
    w = w_ref[...]
    b = b_ref[...]
    taps = []
    for t in range(4):  # static unroll: 4 MXU matmuls sharing the LHS
        acc = jnp.dot(w, p_ref[t], preferred_element_type=jnp.float32) + b
        taps.append(acc)
    if pool == "max":
        # ReLU is monotonic: MaxPool(ReLU(x)) == ReLU(MaxPool(x)).
        r = jnp.maximum(jnp.maximum(taps[0], taps[1]),
                        jnp.maximum(taps[2], taps[3]))
        r = jnp.maximum(r, 0.0)
    else:  # "avg": ReLU must be applied per tap before averaging.
        r = (jnp.maximum(taps[0], 0.0) + jnp.maximum(taps[1], 0.0)
             + jnp.maximum(taps[2], 0.0) + jnp.maximum(taps[3], 0.0)) * 0.25
    o_ref[...] = r.astype(o_ref.dtype)


def conv_relu_pool(patches, w, b, *, pool, big_tile=512):
    """patches: (4, K, M) bf16; w: (Cout, K) bf16; b: (Cout, 1) f32.

    Returns (Cout, M) bf16 = pool2x2(relu(conv)).  Tiled over the lane axis M
    (= batch * pooled spatial); M axis marked "parallel" for megacore.
    """
    _, K, M = patches.shape
    Cout = w.shape[0]
    Mr = _round_up(M, 128)
    tile_m = Mr if Mr <= 1024 else big_tile
    Mp = _round_up(M, tile_m)
    if Mp != M:
        patches = jnp.pad(patches, ((0, 0), (0, 0), (0, Mp - M)))
    out = pl.pallas_call(
        functools.partial(_conv_relu_pool_kernel, pool=pool),
        out_shape=jax.ShapeDtypeStruct((Cout, Mp), jnp.bfloat16),
        grid=(Mp // tile_m,),
        in_specs=[
            pl.BlockSpec((4, K, tile_m), lambda i: (0, 0, i)),
            pl.BlockSpec((Cout, K), lambda i: (0, 0)),
            pl.BlockSpec((Cout, 1), lambda i: (0, 0)),
        ],
        out_specs=pl.BlockSpec((Cout, tile_m), lambda i: (0, i)),
        compiler_params=pltpu.CompilerParams(
            dimension_semantics=("parallel",)),
    )(patches, w, b)
    return out[:, :M] if Mp != M else out


def _classifier_kernel(x_ref, w3_ref, b3_ref, w4_ref, b4_ref, w5_ref, b5_ref,
                       o_ref):
    # Fused Linear(512,200)+ReLU -> Linear(200,200)+ReLU -> Linear(200,Npad).
    # All weights VMEM-resident; intermediates never touch HBM.
    h = jnp.dot(x_ref[...], w3_ref[...], preferred_element_type=jnp.float32)
    h = jnp.maximum(h + b3_ref[...], 0.0)
    h = jnp.dot(h.astype(w4_ref.dtype), w4_ref[...],
                preferred_element_type=jnp.float32)
    h = jnp.maximum(h + b4_ref[...], 0.0)
    h = jnp.dot(h.astype(w5_ref.dtype), w5_ref[...],
                preferred_element_type=jnp.float32)
    o_ref[...] = (h + b5_ref[...]).astype(o_ref.dtype)


def classifier_fused(x, w3, b3, w4, b4, w5p, b5p, num_actions, *, tile_b=256):
    """Fused 3-layer MLP.  x: (B, 512) bf16; w5p/b5p lane-padded to 128."""
    B, K = x.shape
    Npad = w5p.shape[1]
    tile_b = min(tile_b, _round_up(B, 8))
    Bp = _round_up(B, tile_b)
    if Bp != B:
        x = jnp.pad(x, ((0, Bp - B), (0, 0)))
    H1 = w3.shape[1]
    H2 = w4.shape[1]
    out = pl.pallas_call(
        _classifier_kernel,
        out_shape=jax.ShapeDtypeStruct((Bp, Npad), jnp.float32),
        grid=(Bp // tile_b,),
        in_specs=[
            pl.BlockSpec((tile_b, K), lambda i: (i, 0)),
            pl.BlockSpec((K, H1), lambda i: (0, 0)),
            pl.BlockSpec((1, H1), lambda i: (0, 0)),
            pl.BlockSpec((H1, H2), lambda i: (0, 0)),
            pl.BlockSpec((1, H2), lambda i: (0, 0)),
            pl.BlockSpec((H2, Npad), lambda i: (0, 0)),
            pl.BlockSpec((1, Npad), lambda i: (0, 0)),
        ],
        out_specs=pl.BlockSpec((tile_b, Npad), lambda i: (i, 0)),
        compiler_params=pltpu.CompilerParams(
            dimension_semantics=("parallel",)),
    )(x, w3, b3, w4, b4, w5p, b5p)
    return out[:B, :num_actions]


# ----------------------------------------------------------------------------
# Glue: im2col with pooling-tap-major columns (pure XLA slicing), param prep
# ----------------------------------------------------------------------------
# TODO(synk): for very large replay-batch sizes, fold im2col into the conv
# kernel via a (kh,kw) "arbitrary" reduction grid axis indexing the input
# directly, instead of materializing the patch matrix in HBM.
def im2col_pool_cbhw(x, K, stride):
    """x: (C, B, H, W) -> patches (4, C*K*K, B*Hp*Wp), Hp, Wp.

    Leading axis enumerates the 2x2 pooling taps over the conv-output grid;
    rows are ordered (c, kh, kw) to match a reshaped PyTorch conv weight;
    columns are ordered (b, hp, wp).
    """
    C, B, H, W = x.shape
    Ho = (H - K) // stride + 1
    Wo = (W - K) // stride + 1
    Hp, Wp = Ho // 2, Wo // 2
    taps = []
    for dh in range(2):
        for dw in range(2):
            cols = []
            for kh in range(K):
                for kw in range(K):
                    h0 = kh + stride * dh
                    w0 = kw + stride * dw
                    cols.append(
                        x[:, :, h0:h0 + 2 * stride * Hp:2 * stride,
                              w0:w0 + 2 * stride * Wp:2 * stride])
            t = jnp.stack(cols, axis=1)                  # (C, K*K, B, Hp, Wp)
            taps.append(t.reshape(C * K * K, B * Hp * Wp))
    return jnp.stack(taps, axis=0), Hp, Wp               # (4, C*K*K, M)


def init_params(key, num_actions, in_channels):
    """PyTorch-layout parameters (same init scheme as nn.Conv2d / nn.Linear)."""
    ks = jax.random.split(key, 10)

    def uniform(k, shape, fan_in):
        bound = 1.0 / jnp.sqrt(jnp.float32(fan_in))
        return jax.random.uniform(k, shape, jnp.float32, -bound, bound)

    p = {}
    # conv1: Conv2d(in_channels, 16, 4, stride=2)
    p["w1"] = uniform(ks[0], (16, in_channels, 4, 4), in_channels * 16)
    p["b1"] = uniform(ks[1], (16,), in_channels * 16)
    # conv2: Conv2d(16, 32, 4, stride=2)
    p["w2"] = uniform(ks[2], (32, 16, 4, 4), 16 * 16)
    p["b2"] = uniform(ks[3], (32,), 16 * 16)
    # fc1: Linear(512, 200)   (PyTorch weight layout: (out, in))
    p["w3"] = uniform(ks[4], (200, 512), 512)
    p["b3"] = uniform(ks[5], (200,), 512)
    # fc2: Linear(200, 200)
    p["w4"] = uniform(ks[6], (200, 200), 200)
    p["b4"] = uniform(ks[7], (200,), 200)
    # fc3: Linear(200, num_actions)
    p["w5"] = uniform(ks[8], (num_actions, 200), 200)
    p["b5"] = uniform(ks[9], (num_actions,), 200)
    return p


def prepare_params(p, num_actions):
    """One-time layout/dtype prep: conv weights in native (Cout, Cin*Kh*Kw)
    matmul layout, FC weights transposed, biases column/row vectors in f32,
    final layer lane-padded to 128 columns.  All matmul operands bf16."""
    out = {}
    out["c1w"] = p["w1"].reshape(p["w1"].shape[0], -1).astype(jnp.bfloat16)
    out["c1b"] = p["b1"].reshape(-1, 1).astype(jnp.float32)
    out["c2w"] = p["w2"].reshape(p["w2"].shape[0], -1).astype(jnp.bfloat16)
    out["c2b"] = p["b2"].reshape(-1, 1).astype(jnp.float32)
    out["f1w"] = jnp.transpose(p["w3"]).astype(jnp.bfloat16)       # (512, 200)
    out["f1b"] = p["b3"].reshape(1, -1).astype(jnp.float32)
    out["f2w"] = jnp.transpose(p["w4"]).astype(jnp.bfloat16)       # (200, 200)
    out["f2b"] = p["b4"].reshape(1, -1).astype(jnp.float32)
    npad = _round_up(max(num_actions, 1), 128)
    w5 = jnp.transpose(p["w5"])                                    # (200, A)
    out["f3w"] = jnp.pad(w5, ((0, 0), (0, npad - num_actions))).astype(jnp.bfloat16)
    out["f3b"] = jnp.pad(p["b5"], (0, npad - num_actions)).reshape(1, -1).astype(jnp.float32)
    out["num_actions"] = num_actions
    return out


# ----------------------------------------------------------------------------
# Forward pass
# ----------------------------------------------------------------------------
def double_q_forward(prep, x_nchw):
    B = x_nchw.shape[0]
    # Channel-first internal layout (C, B, H, W); bf16 MXU operands.
    x = jnp.transpose(x_nchw, (1, 0, 2, 3)).astype(jnp.bfloat16)

    # --- features ---
    # Conv2d(in_ch, 16, k=4, s=2) + ReLU + MaxPool2d(2,2)  (one fused kernel)
    p, Hp, Wp = im2col_pool_cbhw(x, K=4, stride=2)       # (4, 16*in_ch, B*18*18)
    y = conv_relu_pool(p, prep["c1w"], prep["c1b"], pool="max")   # (16, B*324)
    y = y.reshape(16, B, Hp, Wp)                          # (16, B, 18, 18)

    # Conv2d(16, 32, k=4, s=2) + ReLU + AvgPool2d(2,2)     (one fused kernel)
    p, Hp, Wp = im2col_pool_cbhw(y, K=4, stride=2)        # (4, 256, B*16)
    y = conv_relu_pool(p, prep["c2w"], prep["c2b"], pool="avg")   # (32, B*16)
    y = y.reshape(32, B, Hp * Wp)                         # (32, B, 16)

    # Flatten with PyTorch's NCHW (C, H, W) ordering -> (B, 512)
    feat = jnp.transpose(y, (1, 0, 2)).reshape(B, 32 * Hp * Wp)   # bf16

    # --- classifier (fused: Linear+ReLU, Linear+ReLU, Linear) ---
    out = classifier_fused(feat, prep["f1w"], prep["f1b"],
                           prep["f2w"], prep["f2b"],
                           prep["f3w"], prep["f3b"],
                           prep["num_actions"])
    return out


if __name__ == "__main__":
    num_actions = 6
    in_channels = 4
    batch = 2
    spatial = 74  # required by Linear(512, 200): 74 -> 36 -> 18 -> 8 -> 4

    key = jax.random.PRNGKey(0)
    kp, kx = jax.random.split(key)
    params = init_params(kp, num_actions, in_channels)
    prep = prepare_params(params, num_actions)
    x = jax.random.normal(kx, (batch, in_channels, spatial, spatial), jnp.float32)

    fwd = jax.jit(functools.partial(double_q_forward, prep))
    out = fwd(x)
    jax.block_until_ready(out)
    assert out.shape == (batch, num_actions)
    assert out.dtype == jnp.float32
    assert bool(jnp.all(jnp.isfinite(out)))
    print("KERNEL_OK")
</pallas_src>

<mosaic_0001>
module attributes {stable_mosaic.version = 11 : i64} {
  func.func @_conv_relu_pool_kernel(%arg0: i32, %arg1: memref<4x64x768xbf16, #tpu.memory_space<vmem>>, %arg2: memref<16x64xbf16, #tpu.memory_space<vmem>>, %arg3: memref<16x1xf32, #tpu.memory_space<vmem>>, %arg4: memref<16x768xbf16, #tpu.memory_space<vmem>>) attributes {dimension_semantics = [#tpu.dimension_semantics<parallel>], iteration_bounds = array<i64: 1>, scalar_prefetch = 0 : i64, scratch_operands = 0 : i64, tpu.core_type = #tpu.core_type<tc>, window_params = [{transform_indices = @transform_0, window_bounds = array<i64: 4, 64, 768>}, {pipeline_mode = #tpu.pipeline_mode<synchronous>, transform_indices = @transform_1, window_bounds = array<i64: 16, 64>}, {pipeline_mode = #tpu.pipeline_mode<synchronous>, transform_indices = @transform_2, window_bounds = array<i64: 16, 1>}, {transform_indices = @transform_3, window_bounds = array<i64: 16, 768>}]} {
    %c0 = arith.constant 0 : index
    %c0_0 = arith.constant 0 : index
    %0 = vector.load %arg2[%c0, %c0_0] : memref<16x64xbf16, #tpu.memory_space<vmem>>, vector<16x64xbf16>
    %c0_1 = arith.constant 0 : index
    %c0_2 = arith.constant 0 : index
    %1 = vector.load %arg3[%c0_1, %c0_2] : memref<16x1xf32, #tpu.memory_space<vmem>>, vector<16x1xf32>
    %c0_3 = arith.constant 0 : index
    %c0_4 = arith.constant 0 : index
    %c0_5 = arith.constant 0 : index
    %2 = vector.load %arg1[%c0_3, %c0_4, %c0_5] : memref<4x64x768xbf16, #tpu.memory_space<vmem>>, vector<1x64x768xbf16>
    %3 = vector.shape_cast %2 : vector<1x64x768xbf16> to vector<64x768xbf16>
    %cst = arith.constant dense<0.000000e+00> : vector<16x768xf32>
    %4 = tpu.matmul %0, %3, %cst {dimension_numbers = #tpu.dot_dimension_numbers<[1], [0], [0], [1], [0, 0, 1, 1], [], []>} : vector<16x64xbf16>, vector<64x768xbf16>, vector<16x768xf32> -> vector<16x768xf32>
    %5 = vector.broadcast %1 : vector<16x1xf32> to vector<16x768xf32>
    %6 = arith.addf %4, %5 : vector<16x768xf32>
    %c1 = arith.constant 1 : index
    %c0_6 = arith.constant 0 : index
    %c0_7 = arith.constant 0 : index
    %7 = vector.load %arg1[%c1, %c0_6, %c0_7] : memref<4x64x768xbf16, #tpu.memory_space<vmem>>, vector<1x64x768xbf16>
    %8 = vector.shape_cast %7 : vector<1x64x768xbf16> to vector<64x768xbf16>
    %cst_8 = arith.constant dense<0.000000e+00> : vector<16x768xf32>
    %9 = tpu.matmul %0, %8, %cst_8 {dimension_numbers = #tpu.dot_dimension_numbers<[1], [0], [0], [1], [0, 0, 1, 1], [], []>} : vector<16x64xbf16>, vector<64x768xbf16>, vector<16x768xf32> -> vector<16x768xf32>
    %10 = vector.broadcast %1 : vector<16x1xf32> to vector<16x768xf32>
    %11 = arith.addf %9, %10 : vector<16x768xf32>
    %c2 = arith.constant 2 : index
    %c0_9 = arith.constant 0 : index
    %c0_10 = arith.constant 0 : index
    %12 = vector.load %arg1[%c2, %c0_9, %c0_10] : memref<4x64x768xbf16, #tpu.memory_space<vmem>>, vector<1x64x768xbf16>
    %13 = vector.shape_cast %12 : vector<1x64x768xbf16> to vector<64x768xbf16>
    %cst_11 = arith.constant dense<0.000000e+00> : vector<16x768xf32>
    %14 = tpu.matmul %0, %13, %cst_11 {dimension_numbers = #tpu.dot_dimension_numbers<[1], [0], [0], [1], [0, 0, 1, 1], [], []>} : vector<16x64xbf16>, vector<64x768xbf16>, vector<16x768xf32> -> vector<16x768xf32>
    %15 = vector.broadcast %1 : vector<16x1xf32> to vector<16x768xf32>
    %16 = arith.addf %14, %15 : vector<16x768xf32>
    %c3 = arith.constant 3 : index
    %c0_12 = arith.constant 0 : index
    %c0_13 = arith.constant 0 : index
    %17 = vector.load %arg1[%c3, %c0_12, %c0_13] : memref<4x64x768xbf16, #tpu.memory_space<vmem>>, vector<1x64x768xbf16>
    %18 = vector.shape_cast %17 : vector<1x64x768xbf16> to vector<64x768xbf16>
    %cst_14 = arith.constant dense<0.000000e+00> : vector<16x768xf32>
    %19 = tpu.matmul %0, %18, %cst_14 {dimension_numbers = #tpu.dot_dimension_numbers<[1], [0], [0], [1], [0, 0, 1, 1], [], []>} : vector<16x64xbf16>, vector<64x768xbf16>, vector<16x768xf32> -> vector<16x768xf32>
    %20 = vector.broadcast %1 : vector<16x1xf32> to vector<16x768xf32>
    %21 = arith.addf %19, %20 : vector<16x768xf32>
    %22 = arith.maximumf %6, %11 : vector<16x768xf32>
    %23 = arith.maximumf %16, %21 : vector<16x768xf32>
    %24 = arith.maximumf %22, %23 : vector<16x768xf32>
    %cst_15 = arith.constant 0.000000e+00 : f32
    %25 = vector.broadcast %cst_15 : f32 to vector<16x768xf32>
    %26 = arith.maximumf %24, %25 : vector<16x768xf32>
    %27 = arith.truncf %26 : vector<16x768xf32> to vector<16x768xbf16>
    %c0_16 = arith.constant 0 : index
    %c0_17 = arith.constant 0 : index
    %28 = vector.load %arg4[%c0_16, %c0_17] : memref<16x768xbf16, #tpu.memory_space<vmem>>, vector<16x768xbf16>
    tpu.vector_store %arg4[%c0_16, %c0_17], %27 {strides = array<i32>} : memref<16x768xbf16, #tpu.memory_space<vmem>>, vector<16x768xbf16>,
    return
  }
  func.func @transform_0(%arg0: i32) -> (i32, i32, i32) {
    %c0_i32 = arith.constant 0 : i32
    %c0_i32_0 = arith.constant 0 : i32
    %c0_i32_1 = arith.constant 0 : i32
    return %c0_i32, %c0_i32_0, %arg0 : i32, i32, i32
  }
  func.func @transform_1(%arg0: i32) -> (i32, i32) {
    %c0_i32 = arith.constant 0 : i32
    %c0_i32_0 = arith.constant 0 : i32
    %c0_i32_1 = arith.constant 0 : i32
    return %c0_i32, %c0_i32_0 : i32, i32
  }
  func.func @transform_2(%arg0: i32) -> (i32, i32) {
    %c0_i32 = arith.constant 0 : i32
    %c0_i32_0 = arith.constant 0 : i32
    %c0_i32_1 = arith.constant 0 : i32
    return %c0_i32, %c0_i32_0 : i32, i32
  }
  func.func @transform_3(%arg0: i32) -> (i32, i32) {
    %c0_i32 = arith.constant 0 : i32
    %c0_i32_0 = arith.constant 0 : i32
    return %c0_i32, %arg0 : i32, i32
  }
}

module attributes {stable_mosaic.version = 11 : i64} {
  func.func @_conv_relu_pool_kernel(%arg0: i32, %arg1: memref<4x256x128xbf16, #tpu.memory_space<vmem>>, %arg2: memref<32x256xbf16, #tpu.memory_space<vmem>>, %arg3: memref<32x1xf32, #tpu.memory_space<vmem>>, %arg4: memref<32x128xbf16, #tpu.memory_space<vmem>>) attributes {dimension_semantics = [#tpu.dimension_semantics<parallel>], iteration_bounds = array<i64: 1>, scalar_prefetch = 0 : i64, scratch_operands = 0 : i64, tpu.core_type = #tpu.core_type<tc>, window_params = [{transform_indices = @transform_0, window_bounds = array<i64: 4, 256, 128>}, {pipeline_mode = #tpu.pipeline_mode<synchronous>, transform_indices = @transform_1, window_bounds = array<i64: 32, 256>}, {pipeline_mode = #tpu.pipeline_mode<synchronous>, transform_indices = @transform_2, window_bounds = array<i64: 32, 1>}, {transform_indices = @transform_3, window_bounds = array<i64: 32, 128>}]} {
    %c0 = arith.constant 0 : index
    %c0_0 = arith.constant 0 : index
    %0 = vector.load %arg2[%c0, %c0_0] : memref<32x256xbf16, #tpu.memory_space<vmem>>, vector<32x256xbf16>
    %c0_1 = arith.constant 0 : index
    %c0_2 = arith.constant 0 : index
    %1 = vector.load %arg3[%c0_1, %c0_2] : memref<32x1xf32, #tpu.memory_space<vmem>>, vector<32x1xf32>
    %c0_3 = arith.constant 0 : index
    %c0_4 = arith.constant 0 : index
    %c0_5 = arith.constant 0 : index
    %2 = vector.load %arg1[%c0_3, %c0_4, %c0_5] : memref<4x256x128xbf16, #tpu.memory_space<vmem>>, vector<1x256x128xbf16>
    %3 = vector.shape_cast %2 : vector<1x256x128xbf16> to vector<256x128xbf16>
    %cst = arith.constant dense<0.000000e+00> : vector<32x128xf32>
    %4 = tpu.matmul %0, %3, %cst {dimension_numbers = #tpu.dot_dimension_numbers<[1], [0], [0], [1], [0, 0, 1, 1], [], []>} : vector<32x256xbf16>, vector<256x128xbf16>, vector<32x128xf32> -> vector<32x128xf32>
    %5 = vector.broadcast %1 : vector<32x1xf32> to vector<32x128xf32>
    %6 = arith.addf %4, %5 : vector<32x128xf32>
    %c1 = arith.constant 1 : index
    %c0_6 = arith.constant 0 : index
    %c0_7 = arith.constant 0 : index
    %7 = vector.load %arg1[%c1, %c0_6, %c0_7] : memref<4x256x128xbf16, #tpu.memory_space<vmem>>, vector<1x256x128xbf16>
    %8 = vector.shape_cast %7 : vector<1x256x128xbf16> to vector<256x128xbf16>
    %cst_8 = arith.constant dense<0.000000e+00> : vector<32x128xf32>
    %9 = tpu.matmul %0, %8, %cst_8 {dimension_numbers = #tpu.dot_dimension_numbers<[1], [0], [0], [1], [0, 0, 1, 1], [], []>} : vector<32x256xbf16>, vector<256x128xbf16>, vector<32x128xf32> -> vector<32x128xf32>
    %10 = vector.broadcast %1 : vector<32x1xf32> to vector<32x128xf32>
    %11 = arith.addf %9, %10 : vector<32x128xf32>
    %c2 = arith.constant 2 : index
    %c0_9 = arith.constant 0 : index
    %c0_10 = arith.constant 0 : index
    %12 = vector.load %arg1[%c2, %c0_9, %c0_10] : memref<4x256x128xbf16, #tpu.memory_space<vmem>>, vector<1x256x128xbf16>
    %13 = vector.shape_cast %12 : vector<1x256x128xbf16> to vector<256x128xbf16>
    %cst_11 = arith.constant dense<0.000000e+00> : vector<32x128xf32>
    %14 = tpu.matmul %0, %13, %cst_11 {dimension_numbers = #tpu.dot_dimension_numbers<[1], [0], [0], [1], [0, 0, 1, 1], [], []>} : vector<32x256xbf16>, vector<256x128xbf16>, vector<32x128xf32> -> vector<32x128xf32>
    %15 = vector.broadcast %1 : vector<32x1xf32> to vector<32x128xf32>
    %16 = arith.addf %14, %15 : vector<32x128xf32>
    %c3 = arith.constant 3 : index
    %c0_12 = arith.constant 0 : index
    %c0_13 = arith.constant 0 : index
    %17 = vector.load %arg1[%c3, %c0_12, %c0_13] : memref<4x256x128xbf16, #tpu.memory_space<vmem>>, vector<1x256x128xbf16>
    %18 = vector.shape_cast %17 : vector<1x256x128xbf16> to vector<256x128xbf16>
    %cst_14 = arith.constant dense<0.000000e+00> : vector<32x128xf32>
    %19 = tpu.matmul %0, %18, %cst_14 {dimension_numbers = #tpu.dot_dimension_numbers<[1], [0], [0], [1], [0, 0, 1, 1], [], []>} : vector<32x256xbf16>, vector<256x128xbf16>, vector<32x128xf32> -> vector<32x128xf32>
    %20 = vector.broadcast %1 : vector<32x1xf32> to vector<32x128xf32>
    %21 = arith.addf %19, %20 : vector<32x128xf32>
    %cst_15 = arith.constant 0.000000e+00 : f32
    %22 = vector.broadcast %cst_15 : f32 to vector<32x128xf32>
    %23 = arith.maximumf %6, %22 : vector<32x128xf32>
    %cst_16 = arith.constant 0.000000e+00 : f32
    %24 = vector.broadcast %cst_16 : f32 to vector<32x128xf32>
    %25 = arith.maximumf %11, %24 : vector<32x128xf32>
    %26 = arith.addf %23, %25 : vector<32x128xf32>
    %cst_17 = arith.constant 0.000000e+00 : f32
    %27 = vector.broadcast %cst_17 : f32 to vector<32x128xf32>
    %28 = arith.maximumf %16, %27 : vector<32x128xf32>
    %29 = arith.addf %26, %28 : vector<32x128xf32>
    %cst_18 = arith.constant 0.000000e+00 : f32
    %30 = vector.broadcast %cst_18 : f32 to vector<32x128xf32>
    %31 = arith.maximumf %21, %30 : vector<32x128xf32>
    %32 = arith.addf %29, %31 : vector<32x128xf32>
    %cst_19 = arith.constant 2.500000e-01 : f32
    %33 = vector.broadcast %cst_19 : f32 to vector<32x128xf32>
    %34 = arith.mulf %32, %33 : vector<32x128xf32>
    %35 = arith.truncf %34 : vector<32x128xf32> to vector<32x128xbf16>
    %c0_20 = arith.constant 0 : index
    %c0_21 = arith.constant 0 : index
    %36 = vector.load %arg4[%c0_20, %c0_21] : memref<32x128xbf16, #tpu.memory_space<vmem>>, vector<32x128xbf16>
    tpu.vector_store %arg4[%c0_20, %c0_21], %35 {strides = array<i32>} : memref<32x128xbf16, #tpu.memory_space<vmem>>, vector<32x128xbf16>,
    return
  }
  func.func @transform_0(%arg0: i32) -> (i32, i32, i32) {
    %c0_i32 = arith.constant 0 : i32
    %c0_i32_0 = arith.constant 0 : i32
    %c0_i32_1 = arith.constant 0 : i32
    return %c0_i32, %c0_i32_0, %arg0 : i32, i32, i32
  }
  func.func @transform_1(%arg0: i32) -> (i32, i32) {
    %c0_i32 = arith.constant 0 : i32
    %c0_i32_0 = arith.constant 0 : i32
    %c0_i32_1 = arith.constant 0 : i32
    return %c0_i32, %c0_i32_0 : i32, i32
  }
  func.func @transform_2(%arg0: i32) -> (i32, i32) {
    %c0_i32 = arith.constant 0 : i32
    %c0_i32_0 = arith.constant 0 : i32
    %c0_i32_1 = arith.constant 0 : i32
    return %c0_i32, %c0_i32_0 : i32, i32
  }
  func.func @transform_3(%arg0: i32) -> (i32, i32) {
    %c0_i32 = arith.constant 0 : i32
    %c0_i32_0 = arith.constant 0 : i32
    return %c0_i32, %arg0 : i32, i32
  }
}

module attributes {stable_mosaic.version = 11 : i64} {
  func.func @_classifier_kernel(%arg0: i32, %arg1: memref<8x512xbf16, #tpu.memory_space<vmem>>, %arg2: memref<512x200xbf16, #tpu.memory_space<vmem>>, %arg3: memref<1x200xf32, #tpu.memory_space<vmem>>, %arg4: memref<200x200xbf16, #tpu.memory_space<vmem>>, %arg5: memref<1x200xf32, #tpu.memory_space<vmem>>, %arg6: memref<200x128xbf16, #tpu.memory_space<vmem>>, %arg7: memref<1x128xf32, #tpu.memory_space<vmem>>, %arg8: memref<8x128xf32, #tpu.memory_space<vmem>>) attributes {dimension_semantics = [#tpu.dimension_semantics<parallel>], iteration_bounds = array<i64: 1>, scalar_prefetch = 0 : i64, scratch_operands = 0 : i64, tpu.core_type = #tpu.core_type<tc>, window_params = [{transform_indices = @transform_0, window_bounds = array<i64: 8, 512>}, {pipeline_mode = #tpu.pipeline_mode<synchronous>, transform_indices = @transform_1, window_bounds = array<i64: 512, 200>}, {pipeline_mode = #tpu.pipeline_mode<synchronous>, transform_indices = @transform_2, window_bounds = array<i64: 1, 200>}, {pipeline_mode = #tpu.pipeline_mode<synchronous>, transform_indices = @transform_3, window_bounds = array<i64: 200, 200>}, {pipeline_mode = #tpu.pipeline_mode<synchronous>, transform_indices = @transform_4, window_bounds = array<i64: 1, 200>}, {pipeline_mode = #tpu.pipeline_mode<synchronous>, transform_indices = @transform_5, window_bounds = array<i64: 200, 128>}, {pipeline_mode = #tpu.pipeline_mode<synchronous>, transform_indices = @transform_6, window_bounds = array<i64: 1, 128>}, {transform_indices = @transform_7, window_bounds = array<i64: 8, 128>}]} {
    %c0 = arith.constant 0 : index
    %c0_0 = arith.constant 0 : index
    %0 = vector.load %arg1[%c0, %c0_0] : memref<8x512xbf16, #tpu.memory_space<vmem>>, vector<8x512xbf16>
    %c0_1 = arith.constant 0 : index
    %c0_2 = arith.constant 0 : index
    %1 = vector.load %arg2[%c0_1, %c0_2] : memref<512x200xbf16, #tpu.memory_space<vmem>>, vector<512x200xbf16>
    %cst = arith.constant dense<0.000000e+00> : vector<8x200xf32>
    %2 = tpu.matmul %0, %1, %cst {dimension_numbers = #tpu.dot_dimension_numbers<[1], [0], [0], [1], [0, 0, 1, 1], [], []>} : vector<8x512xbf16>, vector<512x200xbf16>, vector<8x200xf32> -> vector<8x200xf32>
    %c0_3 = arith.constant 0 : index
    %c0_4 = arith.constant 0 : index
    %3 = vector.load %arg3[%c0_3, %c0_4] : memref<1x200xf32, #tpu.memory_space<vmem>>, vector<1x200xf32>
    %4 = vector.broadcast %3 : vector<1x200xf32> to vector<8x200xf32>
    %5 = arith.addf %2, %4 : vector<8x200xf32>
    %cst_5 = arith.constant 0.000000e+00 : f32
    %6 = vector.broadcast %cst_5 : f32 to vector<8x200xf32>
    %7 = arith.maximumf %5, %6 : vector<8x200xf32>
    %8 = arith.truncf %7 : vector<8x200xf32> to vector<8x200xbf16>
    %c0_6 = arith.constant 0 : index
    %c0_7 = arith.constant 0 : index
    %9 = vector.load %arg4[%c0_6, %c0_7] : memref<200x200xbf16, #tpu.memory_space<vmem>>, vector<200x200xbf16>
    %cst_8 = arith.constant dense<0.000000e+00> : vector<8x200xf32>
    %10 = tpu.matmul %8, %9, %cst_8 {dimension_numbers = #tpu.dot_dimension_numbers<[1], [0], [0], [1], [0, 0, 1, 1], [], []>} : vector<8x200xbf16>, vector<200x200xbf16>, vector<8x200xf32> -> vector<8x200xf32>
    %c0_9 = arith.constant 0 : index
    %c0_10 = arith.constant 0 : index
    %11 = vector.load %arg5[%c0_9, %c0_10] : memref<1x200xf32, #tpu.memory_space<vmem>>, vector<1x200xf32>
    %12 = vector.broadcast %11 : vector<1x200xf32> to vector<8x200xf32>
    %13 = arith.addf %10, %12 : vector<8x200xf32>
    %cst_11 = arith.constant 0.000000e+00 : f32
    %14 = vector.broadcast %cst_11 : f32 to vector<8x200xf32>
    %15 = arith.maximumf %13, %14 : vector<8x200xf32>
    %16 = arith.truncf %15 : vector<8x200xf32> to vector<8x200xbf16>
    %c0_12 = arith.constant 0 : index
    %c0_13 = arith.constant 0 : index
    %17 = vector.load %arg6[%c0_12, %c0_13] : memref<200x128xbf16, #tpu.memory_space<vmem>>, vector<200x128xbf16>
    %cst_14 = arith.constant dense<0.000000e+00> : vector<8x128xf32>
    %18 = tpu.matmul %16, %17, %cst_14 {dimension_numbers = #tpu.dot_dimension_numbers<[1], [0], [0], [1], [0, 0, 1, 1], [], []>} : vector<8x200xbf16>, vector<200x128xbf16>, vector<8x128xf32> -> vector<8x128xf32>
    %c0_15 = arith.constant 0 : index
    %c0_16 = arith.constant 0 : index
    %19 = vector.load %arg7[%c0_15, %c0_16] : memref<1x128xf32, #tpu.memory_space<vmem>>, vector<1x128xf32>
    %20 = vector.broadcast %19 : vector<1x128xf32> to vector<8x128xf32>
    %21 = arith.addf %18, %20 : vector<8x128xf32>
    %c0_17 = arith.constant 0 : index
    %c0_18 = arith.constant 0 : index
    %22 = vector.load %arg8[%c0_17, %c0_18] : memref<8x128xf32, #tpu.memory_space<vmem>>, vector<8x128xf32>
    tpu.vector_store %arg8[%c0_17, %c0_18], %21 {strides = array<i32>} : memref<8x128xf32, #tpu.memory_space<vmem>>, vector<8x128xf32>,
    return
  }
  func.func @transform_0(%arg0: i32) -> (i32, i32) {
    %c0_i32 = arith.constant 0 : i32
    %c0_i32_0 = arith.constant 0 : i32
    return %arg0, %c0_i32 : i32, i32
  }
  func.func @transform_1(%arg0: i32) -> (i32, i32) {
    %c0_i32 = arith.constant 0 : i32
    %c0_i32_0 = arith.constant 0 : i32
    %c0_i32_1 = arith.constant 0 : i32
    return %c0_i32, %c0_i32_0 : i32, i32
  }
  func.func @transform_2(%arg0: i32) -> (i32, i32) {
    %c0_i32 = arith.constant 0 : i32
    %c0_i32_0 = arith.constant 0 : i32
    %c0_i32_1 = arith.constant 0 : i32
    return %c0_i32, %c0_i32_0 : i32, i32
  }
  func.func @transform_3(%arg0: i32) -> (i32, i32) {
    %c0_i32 = arith.constant 0 : i32
    %c0_i32_0 = arith.constant 0 : i32
    %c0_i32_1 = arith.constant 0 : i32
    return %c0_i32, %c0_i32_0 : i32, i32
  }
  func.func @transform_4(%arg0: i32) -> (i32, i32) {
    %c0_i32 = arith.constant 0 : i32
    %c0_i32_0 = arith.constant 0 : i32
    %c0_i32_1 = arith.constant 0 : i32
    return %c0_i32, %c0_i32_0 : i32, i32
  }
  func.func @transform_5(%arg0: i32) -> (i32, i32) {
    %c0_i32 = arith.constant 0 : i32
    %c0_i32_0 = arith.constant 0 : i32
    %c0_i32_1 = arith.constant 0 : i32
    return %c0_i32, %c0_i32_0 : i32, i32
  }
  func.func @transform_6(%arg0: i32) -> (i32, i32) {
    %c0_i32 = arith.constant 0 : i32
    %c0_i32_0 = arith.constant 0 : i32
    %c0_i32_1 = arith.constant 0 : i32
    return %c0_i32, %c0_i32_0 : i32, i32
  }
  func.func @transform_7(%arg0: i32) -> (i32, i32) {
    %c0_i32 = arith.constant 0 : i32
    %c0_i32_0 = arith.constant 0 : i32
    return %arg0, %c0_i32 : i32, i32
  }
}

</mosaic_0001>

<llo_original>
// kernel: double_q_forward.3
$region0: #{double_q_forward.3}
  #allocation0 [shape = 'u32[]', space=smem, size = 0x4, offset = 0x4, fixed_abs, tag = 'smem constant byte address 0x4 - core index']
  #allocation1 [shape = 'u32[144,128]{1,0:T(1,128)}', space=vmem, size = 0x12000, scoped, tag = 'internal scratch']
  %s0 = inlined_call_operand.vmem [shape: bf16[4,64,768], index: 0, kind: input, shape index: {}]
  %s1 = inlined_call_operand.vmem [shape: bf16[16,64], index: 1, kind: input, shape index: {}]
  %s2 = inlined_call_operand.vmem [shape: f32[16,1], index: 2, kind: input, shape index: {}]
  %s3 = inlined_call_operand.vmem [shape: bf16[16,768], index: 3, kind: output, shape index: {}]
  %s4 = sld [smem:[#allocation0]]
  $region22: #{double_q_forward.3} parent=0
    _
  %s6 = ssub.s32 1, %s4
  %s7 = scalar_select 0, %s6, %s4
  // Predicated region
  $region2: #{double_q_forward.3} parent=0 // pred_check
    _
  $region3: #{double_q_forward.3} parent=0 // pred_check_branch
    %9 = sbr.rel (0) target = $region5
  $region4: #{double_q_forward.3} parent=0 // pred_region
    _
  $region5: #{double_q_forward.3} parent=0 // pred_fallthru
    _
  // Predicated region
  $region6: #{double_q_forward.3} parent=0 // pred_check
    _
  $region7: #{double_q_forward.3} parent=0 // pred_check_branch
    %11 = sbr.rel (0) target = $region9
  $region8: #{double_q_forward.3} parent=0 // pred_region
    _
  $region9: #{double_q_forward.3} parent=0 // pred_fallthru
    _
  // Predicated region
  $region10: #{double_q_forward.3} parent=0 // pred_check
    _
  $region11: #{double_q_forward.3} parent=0 // pred_check_branch
    %13 = sbr.rel (0) target = $region13
  $region12: #{double_q_forward.3} parent=0 // pred_region
    _
  $region13: #{double_q_forward.3} parent=0 // pred_fallthru
    _
  %v15 = vld [vmem:[%s1] sm:$0xf]
  %v16 = vld [vmem:[%s1 + $0x4] sm:$0xf]
  %v17 = vld [vmem:[%s2] sm:$0xff]
  %v18 = vld [vmem:[%s2 + $0x8] sm:$0xff]
  %v19 = vld [vmem:[%s0] sm:$0xff]
  %v20 = vld [vmem:[%s0 + $0x8] sm:$0xff]
  %v21 = vld [vmem:[%s0 + $0x10] sm:$0xff]
  %v22 = vld [vmem:[%s0 + $0x18] sm:$0xff]
  %v23 = vld [vmem:[%s0 + $0x20] sm:$0xff]
  %v24 = vld [vmem:[%s0 + $0x28] sm:$0xff]
  %v25 = vld [vmem:[%s0 + $0x30] sm:$0xff]
  %v26 = vld [vmem:[%s0 + $0x38] sm:$0xff]
  %v27 = vld [vmem:[%s0 + $0x40] sm:$0xff]
  %v28 = vld [vmem:[%s0 + $0x48] sm:$0xff]
  %v29 = vld [vmem:[%s0 + $0x50] sm:$0xff]
  %v30 = vld [vmem:[%s0 + $0x58] sm:$0xff]
  %v31 = vld [vmem:[%s0 + $0x60] sm:$0xff]
  %v32 = vld [vmem:[%s0 + $0x68] sm:$0xff]
  %v33 = vld [vmem:[%s0 + $0x70] sm:$0xff]
  %v34 = vld [vmem:[%s0 + $0x78] sm:$0xff]
  %v35 = vld [vmem:[%s0 + $0x80] sm:$0xff]
  %v36 = vld [vmem:[%s0 + $0x88] sm:$0xff]
  %v37 = vld [vmem:[%s0 + $0x90] sm:$0xff]
  %v38 = vld [vmem:[%s0 + $0x98] sm:$0xff]
  %v39 = vld [vmem:[%s0 + $0xa0] sm:$0xff]
  %v40 = vld [vmem:[%s0 + $0xa8] sm:$0xff]
  %v41 = vld [vmem:[%s0 + $0xb0] sm:$0xff]
  %v42 = vld [vmem:[%s0 + $0xb8] sm:$0xff]
  %44 = vset.pattern.permute.xlu0 0
  %45 = vperm.xlu0 %44, %v17
  %v46 = vpop.permute.xlu0 %45
  %49 = vset.pattern.permute.xlu0 0
  %50 = vperm.xlu0 %49, %v18
  %v51 = vpop.permute.xlu0 %50
  %v55 = vunpack.c.l.b16 %v15
  %v56 = vunpack.c.l.b16 %v16
  %v57 = vpack.c.b16 %v56, %v55
  %v82 = vunpack.c.l.b16 %v19
  %v83 = vunpack.c.h.b16 %v19
  %v84 = vunpack.c.l.b16 %v20
  %v85 = vunpack.c.h.b16 %v20
  %v86 = vunpack.c.l.b16 %v21
  %v87 = vunpack.c.h.b16 %v21
  %v88 = vunpack.c.l.b16 %v22
  %v89 = vunpack.c.h.b16 %v22
  %v90 = vunpack.c.l.b16 %v23
  %v91 = vunpack.c.h.b16 %v23
  %v92 = vunpack.c.l.b16 %v24
  %v93 = vunpack.c.h.b16 %v24
  %v94 = vunpack.c.l.b16 %v25
  %v95 = vunpack.c.h.b16 %v25
  %v96 = vunpack.c.l.b16 %v26
  %v97 = vunpack.c.h.b16 %v26
  %v98 = vunpack.c.l.b16 %v27
  %v99 = vunpack.c.h.b16 %v27
  %v100 = vunpack.c.l.b16 %v28
  %v101 = vunpack.c.h.b16 %v28
  %v102 = vunpack.c.l.b16 %v29
  %v103 = vunpack.c.h.b16 %v29
  %v104 = vunpack.c.l.b16 %v30
  %v105 = vunpack.c.h.b16 %v30
  %v106 = vunpack.c.l.b16 %v31
  %v107 = vunpack.c.h.b16 %v31
  %v108 = vunpack.c.l.b16 %v32
  %v109 = vunpack.c.h.b16 %v32
  %v110 = vunpack.c.l.b16 %v33
  %v111 = vunpack.c.h.b16 %v33
  %v112 = vunpack.c.l.b16 %v34
  %v113 = vunpack.c.h.b16 %v34
  %v114 = vunpack.c.l.b16 %v35
  %v115 = vunpack.c.h.b16 %v35
  %v116 = vunpack.c.l.b16 %v36
  %v117 = vunpack.c.h.b16 %v36
  %v118 = vunpack.c.l.b16 %v37
  %v119 = vunpack.c.h.b16 %v37
  %v120 = vunpack.c.l.b16 %v38
  %v121 = vunpack.c.h.b16 %v38
  %v122 = vunpack.c.l.b16 %v39
  %v123 = vunpack.c.h.b16 %v39
  %v124 = vunpack.c.l.b16 %v40
  %v125 = vunpack.c.h.b16 %v40
  %v126 = vunpack.c.l.b16 %v41
  %v127 = vunpack.c.h.b16 %v41
  %v128 = vunpack.c.l.b16 %v42
  %v129 = vunpack.c.h.b16 %v42
  %v130 = vpack.c.b16 %v88, %v82
  %v131 = vpack.c.b16 %v89, %v83
  %v132 = vpack.c.b16 %v90, %v84
  %v133 = vpack.c.b16 %v91, %v85
  %v134 = vpack.c.b16 %v92, %v86
  %v135 = vpack.c.b16 %v93, %v87
  %v136 = vpack.c.b16 %v100, %v94
  %v137 = vpack.c.b16 %v101, %v95
  %v138 = vpack.c.b16 %v102, %v96
  %v139 = vpack.c.b16 %v103, %v97
  %v140 = vpack.c.b16 %v104, %v98
  %v141 = vpack.c.b16 %v105, %v99
  %v142 = vpack.c.b16 %v112, %v106
  %v143 = vpack.c.b16 %v113, %v107
  %v144 = vpack.c.b16 %v114, %v108
  %v145 = vpack.c.b16 %v115, %v109
  %v146 = vpack.c.b16 %v116, %v110
  %v147 = vpack.c.b16 %v117, %v111
  %v148 = vpack.c.b16 %v124, %v118
  %v149 = vpack.c.b16 %v125, %v119
  %v150 = vpack.c.b16 %v126, %v120
  %v151 = vpack.c.b16 %v127, %v121
  %v152 = vpack.c.b16 %v128, %v122
  %v153 = vpack.c.b16 %v129, %v123
  %vm178 = vcmask 523264
  %v180 = vsel %vm178, %v57, 0
  %182 = vmatprep.subr.bf16.mxu0 0
  %183 = vmatpush1.bf16.msra.mxu0 0
  %184 = vmatprep.subr.bf16.mxu0 0
  %185 = vmatpush1.bf16.msra.mxu0 0
  %186 = vmatprep.subr.bf16.mxu0 0
  %187 = vmatpush1.bf16.msra.mxu0 0
  %188 = vmatprep.subr.bf16.mxu0 0
  %189 = vmatpush1.bf16.msra.mxu0 0
  %190 = vmatprep.subr.bf16.mxu0 %v149
  %191 = vmatpush1.bf16.msra.mxu0 %v148
  %192 = vmatprep.subr.bf16.mxu0 %v143
  %193 = vmatpush1.bf16.msra.mxu0 %v142
  %194 = vmatprep.subr.bf16.mxu0 %v137
  %195 = vmatpush1.bf16.msra.mxu0 %v136
  %196 = vmatprep.subr.bf16.mxu0 %v131
  %197 = vmatpush1.bf16.msra.mxu0 %v130
  %198 = vmatprep.subr.bf16.mxu0 0
  %199 = vmatpush2.bf16.msra.mxu0 0
  %200 = vmatprep.subr.bf16.mxu0 0
  %201 = vmatpush2.bf16.msra.mxu0 0
  %202 = vmatprep.subr.bf16.mxu0 0
  %203 = vmatpush2.bf16.msra.mxu0 0
  %204 = vmatprep.subr.bf16.mxu0 0
  %205 = vmatpush2.bf16.msra.mxu0 0
  %206 = vmatprep.subr.bf16.mxu0 0
  %207 = vmatpush2.bf16.msra.mxu0 0
  %208 = vmatprep.subr.bf16.mxu0 0
  %209 = vmatpush2.bf16.msra.mxu0 0
  %210 = vmatprep.subr.bf16.mxu0 0
  %211 = vmatpush2.bf16.msra.mxu0 0
  %212 = vmatprep.subr.bf16.mxu0 0
  %213 = vmatpush2.bf16.msra.mxu0 0
  %214 = vmatprep.mubr.bf16.mxu0 0
  %215 = vmatmul.mubr.bf16.gmra.mxu0 %v180
  %v216 = vpop.f32.mrf.mxu0
  %v217 = vadd.f32 %v46, %v216
  %v218 = vpop.f32.mrf.mxu0
  %v219 = vadd.f32 %v46, %v218
  %v220 = vpop.f32.mrf.mxu0
  %v221 = vadd.f32 %v51, %v220
  %v222 = vpop.f32.mrf.mxu0
  %v223 = vadd.f32 %v51, %v222
  %224 = vdwg.mxu0
  %225 = vmatprep.subr.bf16.mxu0 0
  %226 = vmatpush1.bf16.msra.mxu0 0
  %227 = vmatprep.subr.bf16.mxu0 0
  %228 = vmatpush1.bf16.msra.mxu0 0
  %229 = vmatprep.subr.bf16.mxu0 0
  %230 = vmatpush1.bf16.msra.mxu0 0
  %231 = vmatprep.subr.bf16.mxu0 0
  %232 = vmatpush1.bf16.msra.mxu0 0
  %233 = vmatprep.subr.bf16.mxu0 %v151
  %234 = vmatpush1.bf16.msra.mxu0 %v150
  %235 = vmatprep.subr.bf16.mxu0 %v145
  %236 = vmatpush1.bf16.msra.mxu0 %v144
  %237 = vmatprep.subr.bf16.mxu0 %v139
  %238 = vmatpush1.bf16.msra.mxu0 %v138
  %239 = vmatprep.subr.bf16.mxu0 %v133
  %240 = vmatpush1.bf16.msra.mxu0 %v132
  %241 = vmatprep.subr.bf16.mxu0 0
  %242 = vmatpush2.bf16.msra.mxu0 0
  %243 = vmatprep.subr.bf16.mxu0 0
  %244 = vmatpush2.bf16.msra.mxu0 0
  %245 = vmatprep.subr.bf16.mxu0 0
  %246 = vmatpush2.bf16.msra.mxu0 0
  %247 = vmatprep.subr.bf16.mxu0 0
  %248 = vmatpush2.bf16.msra.mxu0 0
  %249 = vmatprep.subr.bf16.mxu0 0
  %250 = vmatpush2.bf16.msra.mxu0 0
  %251 = vmatprep.subr.bf16.mxu0 0
  %252 = vmatpush2.bf16.msra.mxu0 0
  %253 = vmatprep.subr.bf16.mxu0 0
  %254 = vmatpush2.bf16.msra.mxu0 0
  %255 = vmatprep.subr.bf16.mxu0 0
  %256 = vmatpush2.bf16.msra.mxu0 0
  %257 = vmatprep.mubr.bf16.mxu0 0
  %258 = vmatmul.mubr.bf16.gmra.mxu0 %v180
  %v259 = vpop.f32.mrf.mxu0
  %v260 = vadd.f32 %v46, %v259
  %v261 = vpop.f32.mrf.mxu0
  %v262 = vadd.f32 %v46, %v261
  %v263 = vpop.f32.mrf.mxu0
  %v264 = vadd.f32 %v51, %v263
  %v265 = vpop.f32.mrf.mxu0
  %v266 = vadd.f32 %v51, %v265
  %267 = vdwg.mxu0
  %268 = vmatprep.subr.bf16.mxu0 0
  %269 = vmatpush1.bf16.msra.mxu0 0
  %270 = vmatprep.subr.bf16.mxu0 0
  %271 = vmatpush1.bf16.msra.mxu0 0
  %272 = vmatprep.subr.bf16.mxu0 0
  %273 = vmatpush1.bf16.msra.mxu0 0
  %274 = vmatprep.subr.bf16.mxu0 0
  %275 = vmatpush1.bf16.msra.mxu0 0
  %276 = vmatprep.subr.bf16.mxu0 %v153
  %277 = vmatpush1.bf16.msra.mxu0 %v152
  %278 = vmatprep.subr.bf16.mxu0 %v147
  %279 = vmatpush1.bf16.msra.mxu0 %v146
  %280 = vmatprep.subr.bf16.mxu0 %v141
  %281 = vmatpush1.bf16.msra.mxu0 %v140
  %282 = vmatprep.subr.bf16.mxu0 %v135
  %283 = vmatpush1.bf16.msra.mxu0 %v134
  %284 = vmatprep.subr.bf16.mxu0 0
  %285 = vmatpush2.bf16.msra.mxu0 0
  %286 = vmatprep.subr.bf16.mxu0 0
  %287 = vmatpush2.bf16.msra.mxu0 0
  %288 = vmatprep.subr.bf16.mxu0 0
  %289 = vmatpush2.bf16.msra.mxu0 0
  %290 = vmatprep.subr.bf16.mxu0 0
  %291 = vmatpush2.bf16.msra.mxu0 0
  %292 = vmatprep.subr.bf16.mxu0 0
  %293 = vmatpush2.bf16.msra.mxu0 0
  %294 = vmatprep.subr.bf16.mxu0 0
  %295 = vmatpush2.bf16.msra.mxu0 0
  %296 = vmatprep.subr.bf16.mxu0 0
  %297 = vmatpush2.bf16.msra.mxu0 0
  %298 = vmatprep.subr.bf16.mxu0 0
  %299 = vmatpush2.bf16.msra.mxu0 0
  %300 = vmatprep.mubr.bf16.mxu0 0
  %301 = vmatmul.mubr.bf16.gmra.mxu0 %v180
  %v302 = vpop.f32.mrf.mxu0
  %v303 = vadd.f32 %v46, %v302
  %v304 = vpop.f32.mrf.mxu0
  %v305 = vadd.f32 %v46, %v304
  %v306 = vpop.f32.mrf.mxu0
  %v307 = vadd.f32 %v51, %v306
  %v308 = vpop.f32.mrf.mxu0
  %v309 = vadd.f32 %v51, %v308
  %310 = vdwg.mxu0
  %s311 = scalar_lea.vmem %s0, 192
  %v312 = vld [vmem:[%s311] sm:$0xff]
  %v313 = vld [vmem:[%s311 + $0x8] sm:$0xff]
  %v314 = vld [vmem:[%s311 + $0x10] sm:$0xff]
  %v315 = vld [vmem:[%s311 + $0x18] sm:$0xff]
  %v316 = vld [vmem:[%s311 + $0x20] sm:$0xff]
  %v317 = vld [vmem:[%s311 + $0x28] sm:$0xff]
  %v318 = vld [vmem:[%s311 + $0x30] sm:$0xff]
  %v319 = vld [vmem:[%s311 + $0x38] sm:$0xff]
  %v320 = vld [vmem:[%s311 + $0x40] sm:$0xff]
  %v321 = vld [vmem:[%s311 + $0x48] sm:$0xff]
  %v322 = vld [vmem:[%s311 + $0x50] sm:$0xff]
  %v323 = vld [vmem:[%s311 + $0x58] sm:$0xff]
  %v324 = vld [vmem:[%s311 + $0x60] sm:$0xff]
  %v325 = vld [vmem:[%s311 + $0x68] sm:$0xff]
  %v326 = vld [vmem:[%s311 + $0x70] sm:$0xff]
  %v327 = vld [vmem:[%s311 + $0x78] sm:$0xff]
  %v328 = vld [vmem:[%s311 + $0x80] sm:$0xff]
  %v329 = vld [vmem:[%s311 + $0x88] sm:$0xff]
  %v330 = vld [vmem:[%s311 + $0x90] sm:$0xff]
  %v331 = vld [vmem:[%s311 + $0x98] sm:$0xff]
  %v332 = vld [vmem:[%s311 + $0xa0] sm:$0xff]
  %v333 = vld [vmem:[%s311 + $0xa8] sm:$0xff]
  %v334 = vld [vmem:[%s311 + $0xb0] sm:$0xff]
  %v335 = vld [vmem:[%s311 + $0xb8] sm:$0xff]
  %v360 = vunpack.c.l.b16 %v312
  %v361 = vunpack.c.h.b16 %v312
  %v362 = vunpack.c.l.b16 %v313
  %v363 = vunpack.c.h.b16 %v313
  %v364 = vunpack.c.l.b16 %v314
  %v365 = vunpack.c.h.b16 %v314
  %v366 = vunpack.c.l.b16 %v315
  %v367 = vunpack.c.h.b16 %v315
  %v368 = vunpack.c.l.b16 %v316
  %v369 = vunpack.c.h.b16 %v316
  %v370 = vunpack.c.l.b16 %v317
  %v371 = vunpack.c.h.b16 %v317
  %v372 = vunpack.c.l.b16 %v318
  %v373 = vunpack.c.h.b16 %v318
  %v374 = vunpack.c.l.b16 %v319
  %v375 = vunpack.c.h.b16 %v319
  %v376 = vunpack.c.l.b16 %v320
  %v377 = vunpack.c.h.b16 %v320
  %v378 = vunpack.c.l.b16 %v321
  %v379 = vunpack.c.h.b16 %v321
  %v380 = vunpack.c.l.b16 %v322
  %v381 = vunpack.c.h.b16 %v322
  %v382 = vunpack.c.l.b16 %v323
  %v383 = vunpack.c.h.b16 %v323
  %v384 = vunpack.c.l.b16 %v324
  %v385 = vunpack.c.h.b16 %v324
  %v386 = vunpack.c.l.b16 %v325
  %v387 = vunpack.c.h.b16 %v325
  %v388 = vunpack.c.l.b16 %v326
  %v389 = vunpack.c.h.b16 %v326
  %v390 = vunpack.c.l.b16 %v327
  %v391 = vunpack.c.h.b16 %v327
  %v392 = vunpack.c.l.b16 %v328
  %v393 = vunpack.c.h.b16 %v328
  %v394 = vunpack.c.l.b16 %v329
  %v395 = vunpack.c.h.b16 %v329
  %v396 = vunpack.c.l.b16 %v330
  %v397 = vunpack.c.h.b16 %v330
  %v398 = vunpack.c.l.b16 %v331
  %v399 = vunpack.c.h.b16 %v331
  %v400 = vunpack.c.l.b16 %v332
  %v401 = vunpack.c.h.b16 %v332
  %v402 = vunpack.c.l.b16 %v333
  %v403 = vunpack.c.h.b16 %v333
  %v404 = vunpack.c.l.b16 %v334
  %v405 = vunpack.c.h.b16 %v334
  %v406 = vunpack.c.l.b16 %v335
  %v407 = vunpack.c.h.b16 %v335
  %v408 = vpack.c.b16 %v366, %v360
  %v409 = vpack.c.b16 %v367, %v361
  %v410 = vpack.c.b16 %v368, %v362
  %v411 = vpack.c.b16 %v369, %v363
  %v412 = vpack.c.b16 %v370, %v364
  %v413 = vpack.c.b16 %v371, %v365
  %v414 = vpack.c.b16 %v378, %v372
  %v415 = vpack.c.b16 %v379, %v373
  %v416 = vpack.c.b16 %v380, %v374
  %v417 = vpack.c.b16 %v381, %v375
  %v418 = vpack.c.b16 %v382, %v376
  %v419 = vpack.c.b16 %v383, %v377
  %v420 = vpack.c.b16 %v390, %v384
  %v421 = vpack.c.b16 %v391, %v385
  %v422 = vpack.c.b16 %v392, %v386
  %v423 = vpack.c.b16 %v393, %v387
  %v424 = vpack.c.b16 %v394, %v388
  %v425 = vpack.c.b16 %v395, %v389
  %v426 = vpack.c.b16 %v402, %v396
  %v427 = vpack.c.b16 %v403, %v397
  %v428 = vpack.c.b16 %v404, %v398
  %v429 = vpack.c.b16 %v405, %v399
  %v430 = vpack.c.b16 %v406, %v400
  %v431 = vpack.c.b16 %v407, %v401
  %456 = vmatprep.subr.bf16.mxu0 0
  %457 = vmatpush1.bf16.msra.mxu0 0
  %458 = vmatprep.subr.bf16.mxu0 0
  %459 = vmatpush1.bf16.msra.mxu0 0
  %460 = vmatprep.subr.bf16.mxu0 0
  %461 = vmatpush1.bf16.msra.mxu0 0
  %462 = vmatprep.subr.bf16.mxu0 0
  %463 = vmatpush1.bf16.msra.mxu0 0
  %464 = vmatprep.subr.bf16.mxu0 %v427
  %465 = vmatpush1.bf16.msra.mxu0 %v426
  %466 = vmatprep.subr.bf16.mxu0 %v421
  %467 = vmatpush1.bf16.msra.mxu0 %v420
  %468 = vmatprep.subr.bf16.mxu0 %v415
  %469 = vmatpush1.bf16.msra.mxu0 %v414
  %470 = vmatprep.subr.bf16.mxu0 %v409
  %471 = vmatpush1.bf16.msra.mxu0 %v408
  %472 = vmatprep.subr.bf16.mxu0 0
  %473 = vmatpush2.bf16.msra.mxu0 0
  %474 = vmatprep.subr.bf16.mxu0 0
  %475 = vmatpush2.bf16.msra.mxu0 0
  %476 = vmatprep.subr.bf16.mxu0 0
  %477 = vmatpush2.bf16.msra.mxu0 0
  %478 = vmatprep.subr.bf16.mxu0 0
  %479 = vmatpush2.bf16.msra.mxu0 0
  %480 = vmatprep.subr.bf16.mxu0 0
  %481 = vmatpush2.bf16.msra.mxu0 0
  %482 = vmatprep.subr.bf16.mxu0 0
  %483 = vmatpush2.bf16.msra.mxu0 0
  %484 = vmatprep.subr.bf16.mxu0 0
  %485 = vmatpush2.bf16.msra.mxu0 0
  %486 = vmatprep.subr.bf16.mxu0 0
  %487 = vmatpush2.bf16.msra.mxu0 0
  %488 = vmatprep.mubr.bf16.mxu0 0
  %489 = vmatmul.mubr.bf16.gmra.mxu0 %v180
  %v490 = vpop.f32.mrf.mxu0
  %v491 = vadd.f32 %v46, %v490
  %v492 = vpop.f32.mrf.mxu0
  %v493 = vadd.f32 %v46, %v492
  %v494 = vpop.f32.mrf.mxu0
  %v495 = vadd.f32 %v51, %v494
  %v496 = vpop.f32.mrf.mxu0
  %v497 = vadd.f32 %v51, %v496
  %498 = vdwg.mxu0
  %499 = vmatprep.subr.bf16.mxu0 0
  %500 = vmatpush1.bf16.msra.mxu0 0
  %501 = vmatprep.subr.bf16.mxu0 0
  %502 = vmatpush1.bf16.msra.mxu0 0
  %503 = vmatprep.subr.bf16.mxu0 0
  %504 = vmatpush1.bf16.msra.mxu0 0
  %505 = vmatprep.subr.bf16.mxu0 0
  %506 = vmatpush1.bf16.msra.mxu0 0
  %507 = vmatprep.subr.bf16.mxu0 %v429
  %508 = vmatpush1.bf16.msra.mxu0 %v428
  %509 = vmatprep.subr.bf16.mxu0 %v423
  %510 = vmatpush1.bf16.msra.mxu0 %v422
  %511 = vmatprep.subr.bf16.mxu0 %v417
  %512 = vmatpush1.bf16.msra.mxu0 %v416
  %513 = vmatprep.subr.bf16.mxu0 %v411
  %514 = vmatpush1.bf16.msra.mxu0 %v410
  %515 = vmatprep.subr.bf16.mxu0 0
  %516 = vmatpush2.bf16.msra.mxu0 0
  %517 = vmatprep.subr.bf16.mxu0 0
  %518 = vmatpush2.bf16.msra.mxu0 0
  %519 = vmatprep.subr.bf16.mxu0 0
  %520 = vmatpush2.bf16.msra.mxu0 0
  %521 = vmatprep.subr.bf16.mxu0 0
  %522 = vmatpush2.bf16.msra.mxu0 0
  %523 = vmatprep.subr.bf16.mxu0 0
  %524 = vmatpush2.bf16.msra.mxu0 0
  %525 = vmatprep.subr.bf16.mxu0 0
  %526 = vmatpush2.bf16.msra.mxu0 0
  %527 = vmatprep.subr.bf16.mxu0 0
  %528 = vmatpush2.bf16.msra.mxu0 0
  %529 = vmatprep.subr.bf16.mxu0 0
  %530 = vmatpush2.bf16.msra.mxu0 0
  %531 = vmatprep.mubr.bf16.mxu0 0
  %532 = vmatmul.mubr.bf16.gmra.mxu0 %v180
  %v533 = vpop.f32.mrf.mxu0
  %v534 = vadd.f32 %v46, %v533
  %v535 = vpop.f32.mrf.mxu0
  %v536 = vadd.f32 %v46, %v535
  %v537 = vpop.f32.mrf.mxu0
  %v538 = vadd.f32 %v51, %v537
  %v539 = vpop.f32.mrf.mxu0
  %v540 = vadd.f32 %v51, %v539
  %541 = vdwg.mxu0
  %542 = vmatprep.subr.bf16.mxu0 0
  %543 = vmatpush1.bf16.msra.mxu0 0
  %544 = vmatprep.subr.bf16.mxu0 0
  %545 = vmatpush1.bf16.msra.mxu0 0
  %546 = vmatprep.subr.bf16.mxu0 0
  %547 = vmatpush1.bf16.msra.mxu0 0
  %548 = vmatprep.subr.bf16.mxu0 0
  %549 = vmatpush1.bf16.msra.mxu0 0
  %550 = vmatprep.subr.bf16.mxu0 %v431
  %551 = vmatpush1.bf16.msra.mxu0 %v430
  %552 = vmatprep.subr.bf16.mxu0 %v425
  %553 = vmatpush1.bf16.msra.mxu0 %v424
  %554 = vmatprep.subr.bf16.mxu0 %v419
  %555 = vmatpush1.bf16.msra.mxu0 %v418
  %556 = vmatprep.subr.bf16.mxu0 %v413
  %557 = vmatpush1.bf16.msra.mxu0 %v412
  %558 = vmatprep.subr.bf16.mxu0 0
  %559 = vmatpush2.bf16.msra.mxu0 0
  %560 = vmatprep.subr.bf16.mxu0 0
  %561 = vmatpush2.bf16.msra.mxu0 0
  %562 = vmatprep.subr.bf16.mxu0 0
  %563 = vmatpush2.bf16.msra.mxu0 0
  %564 = vmatprep.subr.bf16.mxu0 0
  %565 = vmatpush2.bf16.msra.mxu0 0
  %566 = vmatprep.subr.bf16.mxu0 0
  %567 = vmatpush2.bf16.msra.mxu0 0
  %568 = vmatprep.subr.bf16.mxu0 0
  %569 = vmatpush2.bf16.msra.mxu0 0
  %570 = vmatprep.subr.bf16.mxu0 0
  %571 = vmatpush2.bf16.msra.mxu0 0
  %572 = vmatprep.subr.bf16.mxu0 0
  %573 = vmatpush2.bf16.msra.mxu0 0
  %574 = vmatprep.mubr.bf16.mxu0 0
  %575 = vmatmul.mubr.bf16.gmra.mxu0 %v180
  %v576 = vpop.f32.mrf.mxu0
  %v577 = vadd.f32 %v46, %v576
  %v578 = vpop.f32.mrf.mxu0
  %v579 = vadd.f32 %v46, %v578
  %v580 = vpop.f32.mrf.mxu0
  %v581 = vadd.f32 %v51, %v580
  %v582 = vpop.f32.mrf.mxu0
  %v583 = vadd.f32 %v51, %v582
  %584 = vdwg.mxu0
  %s585 = scalar_lea.vmem %s0, 384
  %v586 = vld [vmem:[%s585] sm:$0xff]
  %v587 = vld [vmem:[%s585 + $0x8] sm:$0xff]
  %v588 = vld [vmem:[%s585 + $0x10] sm:$0xff]
  %v589 = vld [vmem:[%s585 + $0x18] sm:$0xff]
  %v590 = vld [vmem:[%s585 + $0x20] sm:$0xff]
  %v591 = vld [vmem:[%s585 + $0x28] sm:$0xff]
  %v592 = vld [vmem:[%s585 + $0x30] sm:$0xff]
  %v593 = vld [vmem:[%s585 + $0x38] sm:$0xff]
  %v594 = vld [vmem:[%s585 + $0x40] sm:$0xff]
  %v595 = vld [vmem:[%s585 + $0x48] sm:$0xff]
  %v596 = vld [vmem:[%s585 + $0x50] sm:$0xff]
  %v597 = vld [vmem:[%s585 + $0x58] sm:$0xff]
  %v598 = vld [vmem:[%s585 + $0x60] sm:$0xff]
  %v599 = vld [vmem:[%s585 + $0x68] sm:$0xff]
  %v600 = vld [vmem:[%s585 + $0x70] sm:$0xff]
  %v601 = vld [vmem:[%s585 + $0x78] sm:$0xff]
  %v602 = vld [vmem:[%s585 + $0x80] sm:$0xff]
  %v603 = vld [vmem:[%s585 + $0x88] sm:$0xff]
  %v604 = vld [vmem:[%s585 + $0x90] sm:$0xff]
  %v605 = vld [vmem:[%s585 + $0x98] sm:$0xff]
  %v606 = vld [vmem:[%s585 + $0xa0] sm:$0xff]
  %v607 = vld [vmem:[%s585 + $0xa8] sm:$0xff]
  %v608 = vld [vmem:[%s585 + $0xb0] sm:$0xff]
  %v609 = vld [vmem:[%s585 + $0xb8] sm:$0xff]
  %v634 = vunpack.c.l.b16 %v586
  %v635 = vunpack.c.h.b16 %v586
  %v636 = vunpack.c.l.b16 %v587
  %v637 = vunpack.c.h.b16 %v587
  %v638 = vunpack.c.l.b16 %v588
  %v639 = vunpack.c.h.b16 %v588
  %v640 = vunpack.c.l.b16 %v589
  %v641 = vunpack.c.h.b16 %v589
  %v642 = vunpack.c.l.b16 %v590
  %v643 = vunpack.c.h.b16 %v590
  %v644 = vunpack.c.l.b16 %v591
  %v645 = vunpack.c.h.b16 %v591
  %v646 = vunpack.c.l.b16 %v592
  %v647 = vunpack.c.h.b16 %v592
  %v648 = vunpack.c.l.b16 %v593
  %v649 = vunpack.c.h.b16 %v593
  %v650 = vunpack.c.l.b16 %v594
  %v651 = vunpack.c.h.b16 %v594
  %v652 = vunpack.c.l.b16 %v595
  %v653 = vunpack.c.h.b16 %v595
  %v654 = vunpack.c.l.b16 %v596
  %v655 = vunpack.c.h.b16 %v596
  %v656 = vunpack.c.l.b16 %v597
  %v657 = vunpack.c.h.b16 %v597
  %v658 = vunpack.c.l.b16 %v598
  %v659 = vunpack.c.h.b16 %v598
  %v660 = vunpack.c.l.b16 %v599
  %v661 = vunpack.c.h.b16 %v599
  %v662 = vunpack.c.l.b16 %v600
  %v663 = vunpack.c.h.b16 %v600
  %v664 = vunpack.c.l.b16 %v601
  %v665 = vunpack.c.h.b16 %v601
  %v666 = vunpack.c.l.b16 %v602
  %v667 = vunpack.c.h.b16 %v602
  %v668 = vunpack.c.l.b16 %v603
  %v669 = vunpack.c.h.b16 %v603
  %v670 = vunpack.c.l.b16 %v604
  %v671 = vunpack.c.h.b16 %v604
  %v672 = vunpack.c.l.b16 %v605
  %v673 = vunpack.c.h.b16 %v605
  %v674 = vunpack.c.l.b16 %v606
  %v675 = vunpack.c.h.b16 %v606
  %v676 = vunpack.c.l.b16 %v607
  %v677 = vunpack.c.h.b16 %v607
  %v678 = vunpack.c.l.b16 %v608
  %v679 = vunpack.c.h.b16 %v608
  %v680 = vunpack.c.l.b16 %v609
  %v681 = vunpack.c.h.b16 %v609
  %v682 = vpack.c.b16 %v640, %v634
  %v683 = vpack.c.b16 %v641, %v635
  %v684 = vpack.c.b16 %v642, %v636
  %v685 = vpack.c.b16 %v643, %v637
  %v686 = vpack.c.b16 %v644, %v638
  %v687 = vpack.c.b16 %v645, %v639
  %v688 = vpack.c.b16 %v652, %v646
  %v689 = vpack.c.b16 %v653, %v647
  %v690 = vpack.c.b16 %v654, %v648
  %v691 = vpack.c.b16 %v655, %v649
  %v692 = vpack.c.b16 %v656, %v650
  %v693 = vpack.c.b16 %v657, %v651
  %v694 = vpack.c.b16 %v664, %v658
  %v695 = vpack.c.b16 %v665, %v659
  %v696 = vpack.c.b16 %v666, %v660
  %v697 = vpack.c.b16 %v667, %v661
  %v698 = vpack.c.b16 %v668, %v662
  %v699 = vpack.c.b16 %v669, %v663
  %v700 = vpack.c.b16 %v676, %v670
  %v701 = vpack.c.b16 %v677, %v671
  %v702 = vpack.c.b16 %v678, %v672
  %v703 = vpack.c.b16 %v679, %v673
  %v704 = vpack.c.b16 %v680, %v674
  %v705 = vpack.c.b16 %v681, %v675
  %730 = vmatprep.subr.bf16.mxu0 0
  %731 = vmatpush1.bf16.msra.mxu0 0
  %732 = vmatprep.subr.bf16.mxu0 0
  %733 = vmatpush1.bf16.msra.mxu0 0
  %734 = vmatprep.subr.bf16.mxu0 0
  %735 = vmatpush1.bf16.msra.mxu0 0
  %736 = vmatprep.subr.bf16.mxu0 0
  %737 = vmatpush1.bf16.msra.mxu0 0
  %738 = vmatprep.subr.bf16.mxu0 %v701
  %739 = vmatpush1.bf16.msra.mxu0 %v700
  %740 = vmatprep.subr.bf16.mxu0 %v695
  %741 = vmatpush1.bf16.msra.mxu0 %v694
  %742 = vmatprep.subr.bf16.mxu0 %v689
  %743 = vmatpush1.bf16.msra.mxu0 %v688
  %744 = vmatprep.subr.bf16.mxu0 %v683
  %745 = vmatpush1.bf16.msra.mxu0 %v682
  %746 = vmatprep.subr.bf16.mxu0 0
  %747 = vmatpush2.bf16.msra.mxu0 0
  %748 = vmatprep.subr.bf16.mxu0 0
  %749 = vmatpush2.bf16.msra.mxu0 0
  %750 = vmatprep.subr.bf16.mxu0 0
  %751 = vmatpush2.bf16.msra.mxu0 0
  %752 = vmatprep.subr.bf16.mxu0 0
  %753 = vmatpush2.bf16.msra.mxu0 0
  %754 = vmatprep.subr.bf16.mxu0 0
  %755 = vmatpush2.bf16.msra.mxu0 0
  %756 = vmatprep.subr.bf16.mxu0 0
  %757 = vmatpush2.bf16.msra.mxu0 0
  %758 = vmatprep.subr.bf16.mxu0 0
  %759 = vmatpush2.bf16.msra.mxu0 0
  %760 = vmatprep.subr.bf16.mxu0 0
  %761 = vmatpush2.bf16.msra.mxu0 0
  %762 = vmatprep.mubr.bf16.mxu0 0
  %763 = vmatmul.mubr.bf16.gmra.mxu0 %v180
  %v764 = vpop.f32.mrf.mxu0
  %v765 = vadd.f32 %v46, %v764
  %v766 = vpop.f32.mrf.mxu0
  %v767 = vadd.f32 %v46, %v766
  %v768 = vpop.f32.mrf.mxu0
  %v769 = vadd.f32 %v51, %v768
  %v770 = vpop.f32.mrf.mxu0
  %v771 = vadd.f32 %v51, %v770
  %772 = vdwg.mxu0
  %773 = vmatprep.subr.bf16.mxu0 0
  %774 = vmatpush1.bf16.msra.mxu0 0
  %775 = vmatprep.subr.bf16.mxu0 0
  %776 = vmatpush1.bf16.msra.mxu0 0
  %777 = vmatprep.subr.bf16.mxu0 0
  %778 = vmatpush1.bf16.msra.mxu0 0
  %779 = vmatprep.subr.bf16.mxu0 0
  %780 = vmatpush1.bf16.msra.mxu0 0
  %781 = vmatprep.subr.bf16.mxu0 %v703
  %782 = vmatpush1.bf16.msra.mxu0 %v702
  %783 = vmatprep.subr.bf16.mxu0 %v697
  %784 = vmatpush1.bf16.msra.mxu0 %v696
  %785 = vmatprep.subr.bf16.mxu0 %v691
  %786 = vmatpush1.bf16.msra.mxu0 %v690
  %787 = vmatprep.subr.bf16.mxu0 %v685
  %788 = vmatpush1.bf16.msra.mxu0 %v684
  %789 = vmatprep.subr.bf16.mxu0 0
  %790 = vmatpush2.bf16.msra.mxu0 0
  %791 = vmatprep.subr.bf16.mxu0 0
  %792 = vmatpush2.bf16.msra.mxu0 0
  %793 = vmatprep.subr.bf16.mxu0 0
  %794 = vmatpush2.bf16.msra.mxu0 0
  %795 = vmatprep.subr.bf16.mxu0 0
  %796 = vmatpush2.bf16.msra.mxu0 0
  %797 = vmatprep.subr.bf16.mxu0 0
  %798 = vmatpush2.bf16.msra.mxu0 0
  %799 = vmatprep.subr.bf16.mxu0 0
  %800 = vmatpush2.bf16.msra.mxu0 0
  %801 = vmatprep.subr.bf16.mxu0 0
  %802 = vmatpush2.bf16.msra.mxu0 0
  %803 = vmatprep.subr.bf16.mxu0 0
  %804 = vmatpush2.bf16.msra.mxu0 0
  %805 = vmatprep.mubr.bf16.mxu0 0
  %806 = vmatmul.mubr.bf16.gmra.mxu0 %v180
  %v807 = vpop.f32.mrf.mxu0
  %v808 = vadd.f32 %v46, %v807
  %v809 = vpop.f32.mrf.mxu0
  %v810 = vadd.f32 %v46, %v809
  %v811 = vpop.f32.mrf.mxu0
  %v812 = vadd.f32 %v51, %v811
  %v813 = vpop.f32.mrf.mxu0
  %v814 = vadd.f32 %v51, %v813
  %815 = vdwg.mxu0
  %816 = vmatprep.subr.bf16.mxu0 0
  %817 = vmatpush1.bf16.msra.mxu0 0
  %818 = vmatprep.subr.bf16.mxu0 0
  %819 = vmatpush1.bf16.msra.mxu0 0
  %820 = vmatprep.subr.bf16.mxu0 0
  %821 = vmatpush1.bf16.msra.mxu0 0
  %822 = vmatprep.subr.bf16.mxu0 0
  %823 = vmatpush1.bf16.msra.mxu0 0
  %824 = vmatprep.subr.bf16.mxu0 %v705
  %825 = vmatpush1.bf16.msra.mxu0 %v704
  %826 = vmatprep.subr.bf16.mxu0 %v699
  %827 = vmatpush1.bf16.msra.mxu0 %v698
  %828 = vmatprep.subr.bf16.mxu0 %v693
  %829 = vmatpush1.bf16.msra.mxu0 %v692
  %830 = vmatprep.subr.bf16.mxu0 %v687
  %831 = vmatpush1.bf16.msra.mxu0 %v686
  %832 = vmatprep.subr.bf16.mxu0 0
  %833 = vmatpush2.bf16.msra.mxu0 0
  %834 = vmatprep.subr.bf16.mxu0 0
  %835 = vmatpush2.bf16.msra.mxu0 0
  %836 = vmatprep.subr.bf16.mxu0 0
  %837 = vmatpush2.bf16.msra.mxu0 0
  %838 = vmatprep.subr.bf16.mxu0 0
  %839 = vmatpush2.bf16.msra.mxu0 0
  %840 = vmatprep.subr.bf16.mxu0 0
  %841 = vmatpush2.bf16.msra.mxu0 0
  %842 = vmatprep.subr.bf16.mxu0 0
  %843 = vmatpush2.bf16.msra.mxu0 0
  %844 = vmatprep.subr.bf16.mxu0 0
  %845 = vmatpush2.bf16.msra.mxu0 0
  %846 = vmatprep.subr.bf16.mxu0 0
  %847 = vmatpush2.bf16.msra.mxu0 0
  %848 = vmatprep.mubr.bf16.mxu0 0
  %849 = vmatmul.mubr.bf16.gmra.mxu0 %v180
  %v850 = vpop.f32.mrf.mxu0
  %v851 = vadd.f32 %v46, %v850
  %v852 = vpop.f32.mrf.mxu0
  %v853 = vadd.f32 %v46, %v852
  %v854 = vpop.f32.mrf.mxu0
  %v855 = vadd.f32 %v51, %v854
  %v856 = vpop.f32.mrf.mxu0
  %v857 = vadd.f32 %v51, %v856
  %858 = vdwg.mxu0
  %s859 = scalar_lea.vmem %s0, 576
  %v860 = vld [vmem:[%s859] sm:$0xff]
  %v861 = vld [vmem:[%s859 + $0x8] sm:$0xff]
  %v862 = vld [vmem:[%s859 + $0x10] sm:$0xff]
  %v863 = vld [vmem:[%s859 + $0x18] sm:$0xff]
  %v864 = vld [vmem:[%s859 + $0x20] sm:$0xff]
  %v865 = vld [vmem:[%s859 + $0x28] sm:$0xff]
  %v866 = vld [vmem:[%s859 + $0x30] sm:$0xff]
  %v867 = vld [vmem:[%s859 + $0x38] sm:$0xff]
  %v868 = vld [vmem:[%s859 + $0x40] sm:$0xff]
  %v869 = vld [vmem:[%s859 + $0x48] sm:$0xff]
  %v870 = vld [vmem:[%s859 + $0x50] sm:$0xff]
  %v871 = vld [vmem:[%s859 + $0x58] sm:$0xff]
  %v872 = vld [vmem:[%s859 + $0x60] sm:$0xff]
  %v873 = vld [vmem:[%s859 + $0x68] sm:$0xff]
  %v874 = vld [vmem:[%s859 + $0x70] sm:$0xff]
  %v875 = vld [vmem:[%s859 + $0x78] sm:$0xff]
  %v876 = vld [vmem:[%s859 + $0x80] sm:$0xff]
  %v877 = vld [vmem:[%s859 + $0x88] sm:$0xff]
  %v878 = vld [vmem:[%s859 + $0x90] sm:$0xff]
  %v879 = vld [vmem:[%s859 + $0x98] sm:$0xff]
  %v880 = vld [vmem:[%s859 + $0xa0] sm:$0xff]
  %v881 = vld [vmem:[%s859 + $0xa8] sm:$0xff]
  %v882 = vld [vmem:[%s859 + $0xb0] sm:$0xff]
  %v883 = vld [vmem:[%s859 + $0xb8] sm:$0xff]
  %v908 = vunpack.c.l.b16 %v860
  %v909 = vunpack.c.h.b16 %v860
  %v910 = vunpack.c.l.b16 %v861
  %v911 = vunpack.c.h.b16 %v861
  %v912 = vunpack.c.l.b16 %v862
  %v913 = vunpack.c.h.b16 %v862
  %v914 = vunpack.c.l.b16 %v863
  %v915 = vunpack.c.h.b16 %v863
  %v916 = vunpack.c.l.b16 %v864
  %v917 = vunpack.c.h.b16 %v864
  %v918 = vunpack.c.l.b16 %v865
  %v919 = vunpack.c.h.b16 %v865
  %v920 = vunpack.c.l.b16 %v866
  %v921 = vunpack.c.h.b16 %v866
  %v922 = vunpack.c.l.b16 %v867
  %v923 = vunpack.c.h.b16 %v867
  %v924 = vunpack.c.l.b16 %v868
  %v925 = vunpack.c.h.b16 %v868
  %v926 = vunpack.c.l.b16 %v869
  %v927 = vunpack.c.h.b16 %v869
  %v928 = vunpack.c.l.b16 %v870
  %v929 = vunpack.c.h.b16 %v870
  %v930 = vunpack.c.l.b16 %v871
  %v931 = vunpack.c.h.b16 %v871
  %v932 = vunpack.c.l.b16 %v872
  %v933 = vunpack.c.h.b16 %v872
  %v934 = vunpack.c.l.b16 %v873
  %v935 = vunpack.c.h.b16 %v873
  %v936 = vunpack.c.l.b16 %v874
  %v937 = vunpack.c.h.b16 %v874
  %v938 = vunpack.c.l.b16 %v875
  %v939 = vunpack.c.h.b16 %v875
  %v940 = vunpack.c.l.b16 %v876
  %v941 = vunpack.c.h.b16 %v876
  %v942 = vunpack.c.l.b16 %v877
  %v943 = vunpack.c.h.b16 %v877
  %v944 = vunpack.c.l.b16 %v878
  %v945 = vunpack.c.h.b16 %v878
  %v946 = vunpack.c.l.b16 %v879
  %v947 = vunpack.c.h.b16 %v879
  %v948 = vunpack.c.l.b16 %v880
  %v949 = vunpack.c.h.b16 %v880
  %v950 = vunpack.c.l.b16 %v881
  %v951 = vunpack.c.h.b16 %v881
  %v952 = vunpack.c.l.b16 %v882
  %v953 = vunpack.c.h.b16 %v882
  %v954 = vunpack.c.l.b16 %v883
  %v955 = vunpack.c.h.b16 %v883
  %v956 = vpack.c.b16 %v914, %v908
  %v957 = vpack.c.b16 %v915, %v909
  %v958 = vpack.c.b16 %v916, %v910
  %v959 = vpack.c.b16 %v917, %v911
  %v960 = vpack.c.b16 %v918, %v912
  %v961 = vpack.c.b16 %v919, %v913
  %v962 = vpack.c.b16 %v926, %v920
  %v963 = vpack.c.b16 %v927, %v921
  %v964 = vpack.c.b16 %v928, %v922
  %v965 = vpack.c.b16 %v929, %v923
  %v966 = vpack.c.b16 %v930, %v924
  %v967 = vpack.c.b16 %v931, %v925
  %v968 = vpack.c.b16 %v938, %v932
  %v969 = vpack.c.b16 %v939, %v933
  %v970 = vpack.c.b16 %v940, %v934
  %v971 = vpack.c.b16 %v941, %v935
  %v972 = vpack.c.b16 %v942, %v936
  %v973 = vpack.c.b16 %v943, %v937
  %v974 = vpack.c.b16 %v950, %v944
  %v975 = vpack.c.b16 %v951, %v945
  %v976 = vpack.c.b16 %v952, %v946
  %v977 = vpack.c.b16 %v953, %v947
  %v978 = vpack.c.b16 %v954, %v948
  %v979 = vpack.c.b16 %v955, %v949
  %1004 = vmatprep.subr.bf16.mxu0 0
  %1005 = vmatpush1.bf16.msra.mxu0 0
  %1006 = vmatprep.subr.bf16.mxu0 0
  %1007 = vmatpush1.bf16.msra.mxu0 0
  %1008 = vmatprep.subr.bf16.mxu0 0
  %1009 = vmatpush1.bf16.msra.mxu0 0
  %1010 = vmatprep.subr.bf16.mxu0 0
  %1011 = vmatpush1.bf16.msra.mxu0 0
  %1012 = vmatprep.subr.bf16.mxu0 %v975
  %1013 = vmatpush1.bf16.msra.mxu0 %v974
  %1014 = vmatprep.subr.bf16.mxu0 %v969
  %1015 = vmatpush1.bf16.msra.mxu0 %v968
  %1016 = vmatprep.subr.bf16.mxu0 %v963
  %1017 = vmatpush1.bf16.msra.mxu0 %v962
  %1018 = vmatprep.subr.bf16.mxu0 %v957
  %1019 = vmatpush1.bf16.msra.mxu0 %v956
  %1020 = vmatprep.subr.bf16.mxu0 0
  %1021 = vmatpush2.bf16.msra.mxu0 0
  %1022 = vmatprep.subr.bf16.mxu0 0
  %1023 = vmatpush2.bf16.msra.mxu0 0
  %1024 = vmatprep.subr.bf16.mxu0 0
  %1025 = vmatpush2.bf16.msra.mxu0 0
  %1026 = vmatprep.subr.bf16.mxu0 0
  %1027 = vmatpush2.bf16.msra.mxu0 0
  %1028 = vmatprep.subr.bf16.mxu0 0
  %1029 = vmatpush2.bf16.msra.mxu0 0
  %1030 = vmatprep.subr.bf16.mxu0 0
  %1031 = vmatpush2.bf16.msra.mxu0 0
  %1032 = vmatprep.subr.bf16.mxu0 0
  %1033 = vmatpush2.bf16.msra.mxu0 0
  %1034 = vmatprep.subr.bf16.mxu0 0
  %1035 = vmatpush2.bf16.msra.mxu0 0
  %1036 = vmatprep.mubr.bf16.mxu0 0
  %1037 = vmatmul.mubr.bf16.gmra.mxu0 %v180
  %v1038 = vpop.f32.mrf.mxu0
  %v1039 = vadd.f32 %v46, %v1038
  %v1040 = vpop.f32.mrf.mxu0
  %v1041 = vadd.f32 %v46, %v1040
  %v1042 = vpop.f32.mrf.mxu0
  %v1043 = vadd.f32 %v51, %v1042
  %v1044 = vpop.f32.mrf.mxu0
  %v1045 = vadd.f32 %v51, %v1044
  %1046 = vdwg.mxu0
  %1047 = vmatprep.subr.bf16.mxu0 0
  %1048 = vmatpush1.bf16.msra.mxu0 0
  %1049 = vmatprep.subr.bf16.mxu0 0
  %1050 = vmatpush1.bf16.msra.mxu0 0
  %1051 = vmatprep.subr.bf16.mxu0 0
  %1052 = vmatpush1.bf16.msra.mxu0 0
  %1053 = vmatprep.subr.bf16.mxu0 0
  %1054 = vmatpush1.bf16.msra.mxu0 0
  %1055 = vmatprep.subr.bf16.mxu0 %v977
  %1056 = vmatpush1.bf16.msra.mxu0 %v976
  %1057 = vmatprep.subr.bf16.mxu0 %v971
  %1058 = vmatpush1.bf16.msra.mxu0 %v970
  %1059 = vmatprep.subr.bf16.mxu0 %v965
  %1060 = vmatpush1.bf16.msra.mxu0 %v964
  %1061 = vmatprep.subr.bf16.mxu0 %v959
  %1062 = vmatpush1.bf16.msra.mxu0 %v958
  %1063 = vmatprep.subr.bf16.mxu0 0
  %1064 = vmatpush2.bf16.msra.mxu0 0
  %1065 = vmatprep.subr.bf16.mxu0 0
  %1066 = vmatpush2.bf16.msra.mxu0 0
  %1067 = vmatprep.subr.bf16.mxu0 0
  %1068 = vmatpush2.bf16.msra.mxu0 0
  %1069 = vmatprep.subr.bf16.mxu0 0
  %1070 = vmatpush2.bf16.msra.mxu0 0
  %1071 = vmatprep.subr.bf16.mxu0 0
  %1072 = vmatpush2.bf16.msra.mxu0 0
  %1073 = vmatprep.subr.bf16.mxu0 0
  %1074 = vmatpush2.bf16.msra.mxu0 0
  %1075 = vmatprep.subr.bf16.mxu0 0
  %1076 = vmatpush2.bf16.msra.mxu0 0
  %1077 = vmatprep.subr.bf16.mxu0 0
  %1078 = vmatpush2.bf16.msra.mxu0 0
  %1079 = vmatprep.mubr.bf16.mxu0 0
  %1080 = vmatmul.mubr.bf16.gmra.mxu0 %v180
  %v1081 = vpop.f32.mrf.mxu0
  %v1082 = vadd.f32 %v46, %v1081
  %v1083 = vpop.f32.mrf.mxu0
  %v1084 = vadd.f32 %v46, %v1083
  %v1085 = vpop.f32.mrf.mxu0
  %v1086 = vadd.f32 %v51, %v1085
  %v1087 = vpop.f32.mrf.mxu0
  %v1088 = vadd.f32 %v51, %v1087
  %1089 = vdwg.mxu0
  %1090 = vmatprep.subr.bf16.mxu0 0
  %1091 = vmatpush1.bf16.msra.mxu0 0
  %1092 = vmatprep.subr.bf16.mxu0 0
  %1093 = vmatpush1.bf16.msra.mxu0 0
  %1094 = vmatprep.subr.bf16.mxu0 0
  %1095 = vmatpush1.bf16.msra.mxu0 0
  %1096 = vmatprep.subr.bf16.mxu0 0
  %1097 = vmatpush1.bf16.msra.mxu0 0
  %1098 = vmatprep.subr.bf16.mxu0 %v979
  %1099 = vmatpush1.bf16.msra.mxu0 %v978
  %1100 = vmatprep.subr.bf16.mxu0 %v973
  %1101 = vmatpush1.bf16.msra.mxu0 %v972
  %1102 = vmatprep.subr.bf16.mxu0 %v967
  %1103 = vmatpush1.bf16.msra.mxu0 %v966
  %1104 = vmatprep.subr.bf16.mxu0 %v961
  %1105 = vmatpush1.bf16.msra.mxu0 %v960
  %1106 = vmatprep.subr.bf16.mxu0 0
  %1107 = vmatpush2.bf16.msra.mxu0 0
  %1108 = vmatprep.subr.bf16.mxu0 0
  %1109 = vmatpush2.bf16.msra.mxu0 0
  %1110 = vmatprep.subr.bf16.mxu0 0
  %1111 = vmatpush2.bf16.msra.mxu0 0
  %1112 = vmatprep.subr.bf16.mxu0 0
  %1113 = vmatpush2.bf16.msra.mxu0 0
  %1114 = vmatprep.subr.bf16.mxu0 0
  %1115 = vmatpush2.bf16.msra.mxu0 0
  %1116 = vmatprep.subr.bf16.mxu0 0
  %1117 = vmatpush2.bf16.msra.mxu0 0
  %1118 = vmatprep.subr.bf16.mxu0 0
  %1119 = vmatpush2.bf16.msra.mxu0 0
  %1120 = vmatprep.subr.bf16.mxu0 0
  %1121 = vmatpush2.bf16.msra.mxu0 0
  %1122 = vmatprep.mubr.bf16.mxu0 0
  %1123 = vmatmul.mubr.bf16.gmra.mxu0 %v180
  %v1124 = vpop.f32.mrf.mxu0
  %v1125 = vadd.f32 %v46, %v1124
  %v1126 = vpop.f32.mrf.mxu0
  %v1127 = vadd.f32 %v46, %v1126
  %v1128 = vpop.f32.mrf.mxu0
  %v1129 = vadd.f32 %v51, %v1128
  %v1130 = vpop.f32.mrf.mxu0
  %v1131 = vadd.f32 %v51, %v1130
  %1132 = vdwg.mxu0
  %v1133 = vmax.f32 %v217, %v491
  %v1134 = vmax.f32 %v219, %v493
  %v1135 = vmax.f32 %v260, %v534
  %v1136 = vmax.f32 %v262, %v536
  %v1137 = vmax.f32 %v303, %v577
  %v1138 = vmax.f32 %v305, %v579
  %v1139 = vmax.f32 %v221, %v495
  %v1140 = vmax.f32 %v223, %v497
  %v1141 = vmax.f32 %v264, %v538
  %v1142 = vmax.f32 %v266, %v540
  %v1143 = vmax.f32 %v307, %v581
  %v1144 = vmax.f32 %v309, %v583
  %v1145 = vmax.f32 %v765, %v1039
  %v1146 = vmax.f32 %v767, %v1041
  %v1147 = vmax.f32 %v808, %v1082
  %v1148 = vmax.f32 %v810, %v1084
  %v1149 = vmax.f32 %v851, %v1125
  %v1150 = vmax.f32 %v853, %v1127
  %v1151 = vmax.f32 %v769, %v1043
  %v1152 = vmax.f32 %v771, %v1045
  %v1153 = vmax.f32 %v812, %v1086
  %v1154 = vmax.f32 %v814, %v1088
  %v1155 = vmax.f32 %v855, %v1129
  %v1156 = vmax.f32 %v857, %v1131
  %v1157 = vmax.f32 %v1133, %v1145
  %v1158 = vmax.f32 %v1134, %v1146
  %v1159 = vmax.f32 %v1135, %v1147
  %v1160 = vmax.f32 %v1136, %v1148
  %v1161 = vmax.f32 %v1137, %v1149
  %v1162 = vmax.f32 %v1138, %v1150
  %v1163 = vmax.f32 %v1139, %v1151
  %v1164 = vmax.f32 %v1140, %v1152
  %v1165 = vmax.f32 %v1141, %v1153
  %v1166 = vmax.f32 %v1142, %v1154
  %v1167 = vmax.f32 %v1143, %v1155
  %v1168 = vmax.f32 %v1144, %v1156
  %v1169 = vmax.f32 %v1157, 0.0
  %v1170 = vmax.f32 %v1158, 0.0
  %v1171 = vmax.f32 %v1159, 0.0
  %v1172 = vmax.f32 %v1160, 0.0
  %v1173 = vmax.f32 %v1161, 0.0
  %v1174 = vmax.f32 %v1162, 0.0
  %v1175 = vmax.f32 %v1163, 0.0
  %v1176 = vmax.f32 %v1164, 0.0
  %v1177 = vmax.f32 %v1165, 0.0
  %v1178 = vmax.f32 %v1166, 0.0
  %v1179 = vmax.f32 %v1167, 0.0
  %v1180 = vmax.f32 %v1168, 0.0
  %v1181 = vpack.c.bf16 %v1175, %v1169
  %v1182 = vpack.c.bf16 %v1176, %v1170
  %v1183 = vpack.c.bf16 %v1177, %v1171
  %v1184 = vpack.c.bf16 %v1178, %v1172
  %v1185 = vpack.c.bf16 %v1179, %v1173
  %v1186 = vpack.c.bf16 %v1180, %v1174
  %v1193 = vunpack.c.l.b16 %v1181
  %v1194 = vunpack.c.l.b16 %v1182
  %v1195 = vunpack.c.l.b16 %v1183
  %v1196 = vunpack.c.l.b16 %v1184
  %v1197 = vunpack.c.l.b16 %v1185
  %v1198 = vunpack.c.l.b16 %v1186
  %v1199 = vunpack.c.h.b16 %v1181
  %v1200 = vunpack.c.h.b16 %v1182
  %v1201 = vunpack.c.h.b16 %v1183
  %v1202 = vunpack.c.h.b16 %v1184
  %v1203 = vunpack.c.h.b16 %v1185
  %v1204 = vunpack.c.h.b16 %v1186
  %v1205 = vpack.c.b16 %v1194, %v1193
  %v1206 = vpack.c.b16 %v1196, %v1195
  %v1207 = vpack.c.b16 %v1198, %v1197
  %v1208 = vpack.c.b16 %v1200, %v1199
  %v1209 = vpack.c.b16 %v1202, %v1201
  %v1210 = vpack.c.b16 %v1204, %v1203
  %1217 = vst [vmem:[%s3] sm:$0xff] %v1205
  %1218 = vst [vmem:[%s3 + $0x8] sm:$0xff] %v1206
  %1219 = vst [vmem:[%s3 + $0x10] sm:$0xff] %v1207
  %1220 = vst [vmem:[%s3 + $0x18] sm:$0xff] %v1208
  %1221 = vst [vmem:[%s3 + $0x20] sm:$0xff] %v1209
  %1222 = vst [vmem:[%s3 + $0x28] sm:$0xff] %v1210
  // Predicated region
  $region14: #{double_q_forward.3} parent=0 // pred_check
    _
  $region15: #{double_q_forward.3} parent=0 // pred_check_branch
    %1224 = sbr.rel (0) target = $region17
  $region16: #{double_q_forward.3} parent=0 // pred_region
    _
  $region17: #{double_q_forward.3} parent=0 // pred_fallthru
    _
  // Predicated region
  $region18: #{double_q_forward.3} parent=0 // pred_check
    _
  $region19: #{double_q_forward.3} parent=0 // pred_check_branch
    %1226 = sbr.rel (0) target = $region21
  $region20: #{double_q_forward.3} parent=0 // pred_region
    _
  $region21: #{double_q_forward.3} parent=0 // pred_fallthru
    _

// kernel: double_q_forward.4
$region0: #{double_q_forward.4}
  #allocation0 [shape = 'u32[]', space=smem, size = 0x4, offset = 0x4, fixed_abs, tag = 'smem constant byte address 0x4 - core index']
  #allocation1 [shape = 'u32[144,128]{1,0:T(1,128)}', space=vmem, size = 0x12000, scoped, tag = 'internal scratch']
  %s0 = inlined_call_operand.vmem [shape: bf16[4,256,128], index: 0, kind: input, shape index: {}]
  %s1 = inlined_call_operand.vmem [shape: bf16[32,256], index: 1, kind: input, shape index: {}]
  %s2 = inlined_call_operand.vmem [shape: f32[32,1], index: 2, kind: input, shape index: {}]
  %s3 = inlined_call_operand.vmem [shape: bf16[32,128], index: 3, kind: output, shape index: {}]
  %s4 = sld [smem:[#allocation0]]
  $region22: #{double_q_forward.4} parent=0
    _
  %s6 = ssub.s32 1, %s4
  %s7 = scalar_select 0, %s6, %s4
  // Predicated region
  $region2: #{double_q_forward.4} parent=0 // pred_check
    _
  $region3: #{double_q_forward.4} parent=0 // pred_check_branch
    %9 = sbr.rel (0) target = $region5
  $region4: #{double_q_forward.4} parent=0 // pred_region
    _
  $region5: #{double_q_forward.4} parent=0 // pred_fallthru
    _
  // Predicated region
  $region6: #{double_q_forward.4} parent=0 // pred_check
    _
  $region7: #{double_q_forward.4} parent=0 // pred_check_branch
    %11 = sbr.rel (0) target = $region9
  $region8: #{double_q_forward.4} parent=0 // pred_region
    _
  $region9: #{double_q_forward.4} parent=0 // pred_fallthru
    _
  // Predicated region
  $region10: #{double_q_forward.4} parent=0 // pred_check
    _
  $region11: #{double_q_forward.4} parent=0 // pred_check_branch
    %13 = sbr.rel (0) target = $region13
  $region12: #{double_q_forward.4} parent=0 // pred_region
    _
  $region13: #{double_q_forward.4} parent=0 // pred_fallthru
    _
  %v15 = vld [vmem:[%s1] sm:$0xff]
  %v16 = vld [vmem:[%s1 + $0x8] sm:$0xff]
  %v17 = vld [vmem:[%s1 + $0x10] sm:$0xff]
  %v18 = vld [vmem:[%s1 + $0x18] sm:$0xff]
  %v19 = vld [vmem:[%s2] sm:$0xff]
  %v20 = vld [vmem:[%s2 + $0x8] sm:$0xff]
  %v21 = vld [vmem:[%s2 + $0x10] sm:$0xff]
  %v22 = vld [vmem:[%s2 + $0x18] sm:$0xff]
  %v23 = vld [vmem:[%s0] sm:$0xf]
  %v24 = vld [vmem:[%s0 + $0x4] sm:$0xf]
  %v25 = vld [vmem:[%s0 + $0x8] sm:$0xf]
  %v26 = vld [vmem:[%s0 + $0xc] sm:$0xf]
  %v27 = vld [vmem:[%s0 + $0x10] sm:$0xf]
  %v28 = vld [vmem:[%s0 + $0x14] sm:$0xf]
  %v29 = vld [vmem:[%s0 + $0x18] sm:$0xf]
  %v30 = vld [vmem:[%s0 + $0x1c] sm:$0xf]
  %v31 = vld [vmem:[%s0 + $0x20] sm:$0xf]
  %v32 = vld [vmem:[%s0 + $0x24] sm:$0xf]
  %v33 = vld [vmem:[%s0 + $0x28] sm:$0xf]
  %v34 = vld [vmem:[%s0 + $0x2c] sm:$0xf]
  %v35 = vld [vmem:[%s0 + $0x30] sm:$0xf]
  %v36 = vld [vmem:[%s0 + $0x34] sm:$0xf]
  %v37 = vld [vmem:[%s0 + $0x38] sm:$0xf]
  %v38 = vld [vmem:[%s0 + $0x3c] sm:$0xf]
  %v39 = vld [vmem:[%s0 + $0x40] sm:$0xf]
  %v40 = vld [vmem:[%s0 + $0x44] sm:$0xf]
  %v41 = vld [vmem:[%s0 + $0x48] sm:$0xf]
  %v42 = vld [vmem:[%s0 + $0x4c] sm:$0xf]
  %v43 = vld [vmem:[%s0 + $0x50] sm:$0xf]
  %v44 = vld [vmem:[%s0 + $0x54] sm:$0xf]
  %v45 = vld [vmem:[%s0 + $0x58] sm:$0xf]
  %v46 = vld [vmem:[%s0 + $0x5c] sm:$0xf]
  %v47 = vld [vmem:[%s0 + $0x60] sm:$0xf]
  %v48 = vld [vmem:[%s0 + $0x64] sm:$0xf]
  %v49 = vld [vmem:[%s0 + $0x68] sm:$0xf]
  %v50 = vld [vmem:[%s0 + $0x6c] sm:$0xf]
  %v51 = vld [vmem:[%s0 + $0x70] sm:$0xf]
  %v52 = vld [vmem:[%s0 + $0x74] sm:$0xf]
  %v53 = vld [vmem:[%s0 + $0x78] sm:$0xf]
  %v54 = vld [vmem:[%s0 + $0x7c] sm:$0xf]
  %56 = vset.pattern.permute.xlu0 0
  %57 = vperm.xlu0 %56, %v19
  %v58 = vpop.permute.xlu0 %57
  %61 = vset.pattern.permute.xlu0 0
  %62 = vperm.xlu0 %61, %v20
  %v63 = vpop.permute.xlu0 %62
  %66 = vset.pattern.permute.xlu0 0
  %67 = vperm.xlu0 %66, %v21
  %v68 = vpop.permute.xlu0 %67
  %71 = vset.pattern.permute.xlu0 0
  %72 = vperm.xlu0 %71, %v22
  %v73 = vpop.permute.xlu0 %72
  %v79 = vunpack.c.l.b16 %v15
  %v80 = vunpack.c.h.b16 %v15
  %v81 = vunpack.c.l.b16 %v16
  %v82 = vunpack.c.h.b16 %v16
  %v83 = vunpack.c.l.b16 %v17
  %v84 = vunpack.c.h.b16 %v17
  %v85 = vunpack.c.l.b16 %v18
  %v86 = vunpack.c.h.b16 %v18
  %v87 = vpack.c.b16 %v81, %v79
  %v88 = vpack.c.b16 %v82, %v80
  %v89 = vpack.c.b16 %v85, %v83
  %v90 = vpack.c.b16 %v86, %v84
  %v127 = vunpack.c.l.b16 %v23
  %v128 = vunpack.c.l.b16 %v24
  %v129 = vunpack.c.l.b16 %v25
  %v130 = vunpack.c.l.b16 %v26
  %v131 = vunpack.c.l.b16 %v27
  %v132 = vunpack.c.l.b16 %v28
  %v133 = vunpack.c.l.b16 %v29
  %v134 = vunpack.c.l.b16 %v30
  %v135 = vunpack.c.l.b16 %v31
  %v136 = vunpack.c.l.b16 %v32
  %v137 = vunpack.c.l.b16 %v33
  %v138 = vunpack.c.l.b16 %v34
  %v139 = vunpack.c.l.b16 %v35
  %v140 = vunpack.c.l.b16 %v36
  %v141 = vunpack.c.l.b16 %v37
  %v142 = vunpack.c.l.b16 %v38
  %v143 = vunpack.c.l.b16 %v39
  %v144 = vunpack.c.l.b16 %v40
  %v145 = vunpack.c.l.b16 %v41
  %v146 = vunpack.c.l.b16 %v42
  %v147 = vunpack.c.l.b16 %v43
  %v148 = vunpack.c.l.b16 %v44
  %v149 = vunpack.c.l.b16 %v45
  %v150 = vunpack.c.l.b16 %v46
  %v151 = vunpack.c.l.b16 %v47
  %v152 = vunpack.c.l.b16 %v48
  %v153 = vunpack.c.l.b16 %v49
  %v154 = vunpack.c.l.b16 %v50
  %v155 = vunpack.c.l.b16 %v51
  %v156 = vunpack.c.l.b16 %v52
  %v157 = vunpack.c.l.b16 %v53
  %v158 = vunpack.c.l.b16 %v54
  %v159 = vpack.c.b16 %v128, %v127
  %v160 = vpack.c.b16 %v130, %v129
  %v161 = vpack.c.b16 %v132, %v131
  %v162 = vpack.c.b16 %v134, %v133
  %v163 = vpack.c.b16 %v136, %v135
  %v164 = vpack.c.b16 %v138, %v137
  %v165 = vpack.c.b16 %v140, %v139
  %v166 = vpack.c.b16 %v142, %v141
  %v167 = vpack.c.b16 %v144, %v143
  %v168 = vpack.c.b16 %v146, %v145
  %v169 = vpack.c.b16 %v148, %v147
  %v170 = vpack.c.b16 %v150, %v149
  %v171 = vpack.c.b16 %v152, %v151
  %v172 = vpack.c.b16 %v154, %v153
  %v173 = vpack.c.b16 %v156, %v155
  %v174 = vpack.c.b16 %v158, %v157
  %191 = vmatprep.subr.bf16.mxu0 0
  %192 = vmatpush1.bf16.msra.mxu0 %v166
  %193 = vmatprep.subr.bf16.mxu0 0
  %194 = vmatpush1.bf16.msra.mxu0 %v165
  %195 = vmatprep.subr.bf16.mxu0 0
  %196 = vmatpush1.bf16.msra.mxu0 %v164
  %197 = vmatprep.subr.bf16.mxu0 0
  %198 = vmatpush1.bf16.msra.mxu0 %v163
  %199 = vmatprep.subr.bf16.mxu0 0
  %200 = vmatpush1.bf16.msra.mxu0 %v162
  %201 = vmatprep.subr.bf16.mxu0 0
  %202 = vmatpush1.bf16.msra.mxu0 %v161
  %203 = vmatprep.subr.bf16.mxu0 0
  %204 = vmatpush1.bf16.msra.mxu0 %v160
  %205 = vmatprep.subr.bf16.mxu0 0
  %206 = vmatpush1.bf16.msra.mxu0 %v159
  %207 = vmatprep.subr.bf16.mxu0 0
  %208 = vmatpush2.bf16.msra.mxu0 %v174
  %209 = vmatprep.subr.bf16.mxu0 0
  %210 = vmatpush2.bf16.msra.mxu0 %v173
  %211 = vmatprep.subr.bf16.mxu0 0
  %212 = vmatpush2.bf16.msra.mxu0 %v172
  %213 = vmatprep.subr.bf16.mxu0 0
  %214 = vmatpush2.bf16.msra.mxu0 %v171
  %215 = vmatprep.subr.bf16.mxu0 0
  %216 = vmatpush2.bf16.msra.mxu0 %v170
  %217 = vmatprep.subr.bf16.mxu0 0
  %218 = vmatpush2.bf16.msra.mxu0 %v169
  %219 = vmatprep.subr.bf16.mxu0 0
  %220 = vmatpush2.bf16.msra.mxu0 %v168
  %221 = vmatprep.subr.bf16.mxu0 0
  %222 = vmatpush2.bf16.msra.mxu0 %v167
  %223 = vmatprep.mubr.bf16.mxu0 %v88
  %224 = vmatmul.mubr.bf16.gmra.mxu0 %v87
  %v225 = vpop.f32.mrf.mxu0
  %v226 = vadd.f32 %v58, %v225
  %v227 = vpop.f32.mrf.mxu0
  %v228 = vpop.f32.mrf.mxu0
  %v229 = vadd.f32 %v63, %v228
  %v230 = vpop.f32.mrf.mxu0
  %231 = vmatprep.mubr.bf16.mxu0 %v90
  %232 = vmatmul.mubr.bf16.gmra.mxu0 %v89
  %v233 = vpop.f32.mrf.mxu0
  %v234 = vadd.f32 %v68, %v233
  %v235 = vpop.f32.mrf.mxu0
  %v236 = vpop.f32.mrf.mxu0
  %v237 = vadd.f32 %v73, %v236
  %v238 = vpop.f32.mrf.mxu0
  %239 = vdwg.mxu0
  %s240 = scalar_lea.vmem %s0, 128
  %v241 = vld [vmem:[%s240] sm:$0xf]
  %v242 = vld [vmem:[%s240 + $0x4] sm:$0xf]
  %v243 = vld [vmem:[%s240 + $0x8] sm:$0xf]
  %v244 = vld [vmem:[%s240 + $0xc] sm:$0xf]
  %v245 = vld [vmem:[%s240 + $0x10] sm:$0xf]
  %v246 = vld [vmem:[%s240 + $0x14] sm:$0xf]
  %v247 = vld [vmem:[%s240 + $0x18] sm:$0xf]
  %v248 = vld [vmem:[%s240 + $0x1c] sm:$0xf]
  %v249 = vld [vmem:[%s240 + $0x20] sm:$0xf]
  %v250 = vld [vmem:[%s240 + $0x24] sm:$0xf]
  %v251 = vld [vmem:[%s240 + $0x28] sm:$0xf]
  %v252 = vld [vmem:[%s240 + $0x2c] sm:$0xf]
  %v253 = vld [vmem:[%s240 + $0x30] sm:$0xf]
  %v254 = vld [vmem:[%s240 + $0x34] sm:$0xf]
  %v255 = vld [vmem:[%s240 + $0x38] sm:$0xf]
  %v256 = vld [vmem:[%s240 + $0x3c] sm:$0xf]
  %v257 = vld [vmem:[%s240 + $0x40] sm:$0xf]
  %v258 = vld [vmem:[%s240 + $0x44] sm:$0xf]
  %v259 = vld [vmem:[%s240 + $0x48] sm:$0xf]
  %v260 = vld [vmem:[%s240 + $0x4c] sm:$0xf]
  %v261 = vld [vmem:[%s240 + $0x50] sm:$0xf]
  %v262 = vld [vmem:[%s240 + $0x54] sm:$0xf]
  %v263 = vld [vmem:[%s240 + $0x58] sm:$0xf]
  %v264 = vld [vmem:[%s240 + $0x5c] sm:$0xf]
  %v265 = vld [vmem:[%s240 + $0x60] sm:$0xf]
  %v266 = vld [vmem:[%s240 + $0x64] sm:$0xf]
  %v267 = vld [vmem:[%s240 + $0x68] sm:$0xf]
  %v268 = vld [vmem:[%s240 + $0x6c] sm:$0xf]
  %v269 = vld [vmem:[%s240 + $0x70] sm:$0xf]
  %v270 = vld [vmem:[%s240 + $0x74] sm:$0xf]
  %v271 = vld [vmem:[%s240 + $0x78] sm:$0xf]
  %v272 = vld [vmem:[%s240 + $0x7c] sm:$0xf]
  %v305 = vunpack.c.l.b16 %v241
  %v306 = vunpack.c.l.b16 %v242
  %v307 = vunpack.c.l.b16 %v243
  %v308 = vunpack.c.l.b16 %v244
  %v309 = vunpack.c.l.b16 %v245
  %v310 = vunpack.c.l.b16 %v246
  %v311 = vunpack.c.l.b16 %v247
  %v312 = vunpack.c.l.b16 %v248
  %v313 = vunpack.c.l.b16 %v249
  %v314 = vunpack.c.l.b16 %v250
  %v315 = vunpack.c.l.b16 %v251
  %v316 = vunpack.c.l.b16 %v252
  %v317 = vunpack.c.l.b16 %v253
  %v318 = vunpack.c.l.b16 %v254
  %v319 = vunpack.c.l.b16 %v255
  %v320 = vunpack.c.l.b16 %v256
  %v321 = vunpack.c.l.b16 %v257
  %v322 = vunpack.c.l.b16 %v258
  %v323 = vunpack.c.l.b16 %v259
  %v324 = vunpack.c.l.b16 %v260
  %v325 = vunpack.c.l.b16 %v261
  %v326 = vunpack.c.l.b16 %v262
  %v327 = vunpack.c.l.b16 %v263
  %v328 = vunpack.c.l.b16 %v264
  %v329 = vunpack.c.l.b16 %v265
  %v330 = vunpack.c.l.b16 %v266
  %v331 = vunpack.c.l.b16 %v267
  %v332 = vunpack.c.l.b16 %v268
  %v333 = vunpack.c.l.b16 %v269
  %v334 = vunpack.c.l.b16 %v270
  %v335 = vunpack.c.l.b16 %v271
  %v336 = vunpack.c.l.b16 %v272
  %v337 = vpack.c.b16 %v306, %v305
  %v338 = vpack.c.b16 %v308, %v307
  %v339 = vpack.c.b16 %v310, %v309
  %v340 = vpack.c.b16 %v312, %v311
  %v341 = vpack.c.b16 %v314, %v313
  %v342 = vpack.c.b16 %v316, %v315
  %v343 = vpack.c.b16 %v318, %v317
  %v344 = vpack.c.b16 %v320, %v319
  %v345 = vpack.c.b16 %v322, %v321
  %v346 = vpack.c.b16 %v324, %v323
  %v347 = vpack.c.b16 %v326, %v325
  %v348 = vpack.c.b16 %v328, %v327
  %v349 = vpack.c.b16 %v330, %v329
  %v350 = vpack.c.b16 %v332, %v331
  %v351 = vpack.c.b16 %v334, %v333
  %v352 = vpack.c.b16 %v336, %v335
  %369 = vmatprep.subr.bf16.mxu0 0
  %370 = vmatpush1.bf16.msra.mxu0 %v344
  %371 = vmatprep.subr.bf16.mxu0 0
  %372 = vmatpush1.bf16.msra.mxu0 %v343
  %373 = vmatprep.subr.bf16.mxu0 0
  %374 = vmatpush1.bf16.msra.mxu0 %v342
  %375 = vmatprep.subr.bf16.mxu0 0
  %376 = vmatpush1.bf16.msra.mxu0 %v341
  %377 = vmatprep.subr.bf16.mxu0 0
  %378 = vmatpush1.bf16.msra.mxu0 %v340
  %379 = vmatprep.subr.bf16.mxu0 0
  %380 = vmatpush1.bf16.msra.mxu0 %v339
  %381 = vmatprep.subr.bf16.mxu0 0
  %382 = vmatpush1.bf16.msra.mxu0 %v338
  %383 = vmatprep.subr.bf16.mxu0 0
  %384 = vmatpush1.bf16.msra.mxu0 %v337
  %385 = vmatprep.subr.bf16.mxu0 0
  %386 = vmatpush2.bf16.msra.mxu0 %v352
  %387 = vmatprep.subr.bf16.mxu0 0
  %388 = vmatpush2.bf16.msra.mxu0 %v351
  %389 = vmatprep.subr.bf16.mxu0 0
  %390 = vmatpush2.bf16.msra.mxu0 %v350
  %391 = vmatprep.subr.bf16.mxu0 0
  %392 = vmatpush2.bf16.msra.mxu0 %v349
  %393 = vmatprep.subr.bf16.mxu0 0
  %394 = vmatpush2.bf16.msra.mxu0 %v348
  %395 = vmatprep.subr.bf16.mxu0 0
  %396 = vmatpush2.bf16.msra.mxu0 %v347
  %397 = vmatprep.subr.bf16.mxu0 0
  %398 = vmatpush2.bf16.msra.mxu0 %v346
  %399 = vmatprep.subr.bf16.mxu0 0
  %400 = vmatpush2.bf16.msra.mxu0 %v345
  %401 = vmatprep.mubr.bf16.mxu0 %v88
  %402 = vmatmul.mubr.bf16.gmra.mxu0 %v87
  %v403 = vpop.f32.mrf.mxu0
  %v404 = vadd.f32 %v58, %v403
  %v405 = vpop.f32.mrf.mxu0
  %v406 = vpop.f32.mrf.mxu0
  %v407 = vadd.f32 %v63, %v406
  %v408 = vpop.f32.mrf.mxu0
  %409 = vmatprep.mubr.bf16.mxu0 %v90
  %410 = vmatmul.mubr.bf16.gmra.mxu0 %v89
  %v411 = vpop.f32.mrf.mxu0
  %v412 = vadd.f32 %v68, %v411
  %v413 = vpop.f32.mrf.mxu0
  %v414 = vpop.f32.mrf.mxu0
  %v415 = vadd.f32 %v73, %v414
  %v416 = vpop.f32.mrf.mxu0
  %417 = vdwg.mxu0
  %s418 = scalar_lea.vmem %s0, 256
  %v419 = vld [vmem:[%s418] sm:$0xf]
  %v420 = vld [vmem:[%s418 + $0x4] sm:$0xf]
  %v421 = vld [vmem:[%s418 + $0x8] sm:$0xf]
  %v422 = vld [vmem:[%s418 + $0xc] sm:$0xf]
  %v423 = vld [vmem:[%s418 + $0x10] sm:$0xf]
  %v424 = vld [vmem:[%s418 + $0x14] sm:$0xf]
  %v425 = vld [vmem:[%s418 + $0x18] sm:$0xf]
  %v426 = vld [vmem:[%s418 + $0x1c] sm:$0xf]
  %v427 = vld [vmem:[%s418 + $0x20] sm:$0xf]
  %v428 = vld [vmem:[%s418 + $0x24] sm:$0xf]
  %v429 = vld [vmem:[%s418 + $0x28] sm:$0xf]
  %v430 = vld [vmem:[%s418 + $0x2c] sm:$0xf]
  %v431 = vld [vmem:[%s418 + $0x30] sm:$0xf]
  %v432 = vld [vmem:[%s418 + $0x34] sm:$0xf]
  %v433 = vld [vmem:[%s418 + $0x38] sm:$0xf]
  %v434 = vld [vmem:[%s418 + $0x3c] sm:$0xf]
  %v435 = vld [vmem:[%s418 + $0x40] sm:$0xf]
  %v436 = vld [vmem:[%s418 + $0x44] sm:$0xf]
  %v437 = vld [vmem:[%s418 + $0x48] sm:$0xf]
  %v438 = vld [vmem:[%s418 + $0x4c] sm:$0xf]
  %v439 = vld [vmem:[%s418 + $0x50] sm:$0xf]
  %v440 = vld [vmem:[%s418 + $0x54] sm:$0xf]
  %v441 = vld [vmem:[%s418 + $0x58] sm:$0xf]
  %v442 = vld [vmem:[%s418 + $0x5c] sm:$0xf]
  %v443 = vld [vmem:[%s418 + $0x60] sm:$0xf]
  %v444 = vld [vmem:[%s418 + $0x64] sm:$0xf]
  %v445 = vld [vmem:[%s418 + $0x68] sm:$0xf]
  %v446 = vld [vmem:[%s418 + $0x6c] sm:$0xf]
  %v447 = vld [vmem:[%s418 + $0x70] sm:$0xf]
  %v448 = vld [vmem:[%s418 + $0x74] sm:$0xf]
  %v449 = vld [vmem:[%s418 + $0x78] sm:$0xf]
  %v450 = vld [vmem:[%s418 + $0x7c] sm:$0xf]
  %v483 = vunpack.c.l.b16 %v419
  %v484 = vunpack.c.l.b16 %v420
  %v485 = vunpack.c.l.b16 %v421
  %v486 = vunpack.c.l.b16 %v422
  %v487 = vunpack.c.l.b16 %v423
  %v488 = vunpack.c.l.b16 %v424
  %v489 = vunpack.c.l.b16 %v425
  %v490 = vunpack.c.l.b16 %v426
  %v491 = vunpack.c.l.b16 %v427
  %v492 = vunpack.c.l.b16 %v428
  %v493 = vunpack.c.l.b16 %v429
  %v494 = vunpack.c.l.b16 %v430
  %v495 = vunpack.c.l.b16 %v431
  %v496 = vunpack.c.l.b16 %v432
  %v497 = vunpack.c.l.b16 %v433
  %v498 = vunpack.c.l.b16 %v434
  %v499 = vunpack.c.l.b16 %v435
  %v500 = vunpack.c.l.b16 %v436
  %v501 = vunpack.c.l.b16 %v437
  %v502 = vunpack.c.l.b16 %v438
  %v503 = vunpack.c.l.b16 %v439
  %v504 = vunpack.c.l.b16 %v440
  %v505 = vunpack.c.l.b16 %v441
  %v506 = vunpack.c.l.b16 %v442
  %v507 = vunpack.c.l.b16 %v443
  %v508 = vunpack.c.l.b16 %v444
  %v509 = vunpack.c.l.b16 %v445
  %v510 = vunpack.c.l.b16 %v446
  %v511 = vunpack.c.l.b16 %v447
  %v512 = vunpack.c.l.b16 %v448
  %v513 = vunpack.c.l.b16 %v449
  %v514 = vunpack.c.l.b16 %v450
  %v515 = vpack.c.b16 %v484, %v483
  %v516 = vpack.c.b16 %v486, %v485
  %v517 = vpack.c.b16 %v488, %v487
  %v518 = vpack.c.b16 %v490, %v489
  %v519 = vpack.c.b16 %v492, %v491
  %v520 = vpack.c.b16 %v494, %v493
  %v521 = vpack.c.b16 %v496, %v495
  %v522 = vpack.c.b16 %v498, %v497
  %v523 = vpack.c.b16 %v500, %v499
  %v524 = vpack.c.b16 %v502, %v501
  %v525 = vpack.c.b16 %v504, %v503
  %v526 = vpack.c.b16 %v506, %v505
  %v527 = vpack.c.b16 %v508, %v507
  %v528 = vpack.c.b16 %v510, %v509
  %v529 = vpack.c.b16 %v512, %v511
  %v530 = vpack.c.b16 %v514, %v513
  %547 = vmatprep.subr.bf16.mxu0 0
  %548 = vmatpush1.bf16.msra.mxu0 %v522
  %549 = vmatprep.subr.bf16.mxu0 0
  %550 = vmatpush1.bf16.msra.mxu0 %v521
  %551 = vmatprep.subr.bf16.mxu0 0
  %552 = vmatpush1.bf16.msra.mxu0 %v520
  %553 = vmatprep.subr.bf16.mxu0 0
  %554 = vmatpush1.bf16.msra.mxu0 %v519
  %555 = vmatprep.subr.bf16.mxu0 0
  %556 = vmatpush1.bf16.msra.mxu0 %v518
  %557 = vmatprep.subr.bf16.mxu0 0
  %558 = vmatpush1.bf16.msra.mxu0 %v517
  %559 = vmatprep.subr.bf16.mxu0 0
  %560 = vmatpush1.bf16.msra.mxu0 %v516
  %561 = vmatprep.subr.bf16.mxu0 0
  %562 = vmatpush1.bf16.msra.mxu0 %v515
  %563 = vmatprep.subr.bf16.mxu0 0
  %564 = vmatpush2.bf16.msra.mxu0 %v530
  %565 = vmatprep.subr.bf16.mxu0 0
  %566 = vmatpush2.bf16.msra.mxu0 %v529
  %567 = vmatprep.subr.bf16.mxu0 0
  %568 = vmatpush2.bf16.msra.mxu0 %v528
  %569 = vmatprep.subr.bf16.mxu0 0
  %570 = vmatpush2.bf16.msra.mxu0 %v527
  %571 = vmatprep.subr.bf16.mxu0 0
  %572 = vmatpush2.bf16.msra.mxu0 %v526
  %573 = vmatprep.subr.bf16.mxu0 0
  %574 = vmatpush2.bf16.msra.mxu0 %v525
  %575 = vmatprep.subr.bf16.mxu0 0
  %576 = vmatpush2.bf16.msra.mxu0 %v524
  %577 = vmatprep.subr.bf16.mxu0 0
  %578 = vmatpush2.bf16.msra.mxu0 %v523
  %579 = vmatprep.mubr.bf16.mxu0 %v88
  %580 = vmatmul.mubr.bf16.gmra.mxu0 %v87
  %v581 = vpop.f32.mrf.mxu0
  %v582 = vadd.f32 %v58, %v581
  %v583 = vpop.f32.mrf.mxu0
  %v584 = vpop.f32.mrf.mxu0
  %v585 = vadd.f32 %v63, %v584
  %v586 = vpop.f32.mrf.mxu0
  %587 = vmatprep.mubr.bf16.mxu0 %v90
  %588 = vmatmul.mubr.bf16.gmra.mxu0 %v89
  %v589 = vpop.f32.mrf.mxu0
  %v590 = vadd.f32 %v68, %v589
  %v591 = vpop.f32.mrf.mxu0
  %v592 = vpop.f32.mrf.mxu0
  %v593 = vadd.f32 %v73, %v592
  %v594 = vpop.f32.mrf.mxu0
  %595 = vdwg.mxu0
  %s596 = scalar_lea.vmem %s0, 384
  %v597 = vld [vmem:[%s596] sm:$0xf]
  %v598 = vld [vmem:[%s596 + $0x4] sm:$0xf]
  %v599 = vld [vmem:[%s596 + $0x8] sm:$0xf]
  %v600 = vld [vmem:[%s596 + $0xc] sm:$0xf]
  %v601 = vld [vmem:[%s596 + $0x10] sm:$0xf]
  %v602 = vld [vmem:[%s596 + $0x14] sm:$0xf]
  %v603 = vld [vmem:[%s596 + $0x18] sm:$0xf]
  %v604 = vld [vmem:[%s596 + $0x1c] sm:$0xf]
  %v605 = vld [vmem:[%s596 + $0x20] sm:$0xf]
  %v606 = vld [vmem:[%s596 + $0x24] sm:$0xf]
  %v607 = vld [vmem:[%s596 + $0x28] sm:$0xf]
  %v608 = vld [vmem:[%s596 + $0x2c] sm:$0xf]
  %v609 = vld [vmem:[%s596 + $0x30] sm:$0xf]
  %v610 = vld [vmem:[%s596 + $0x34] sm:$0xf]
  %v611 = vld [vmem:[%s596 + $0x38] sm:$0xf]
  %v612 = vld [vmem:[%s596 + $0x3c] sm:$0xf]
  %v613 = vld [vmem:[%s596 + $0x40] sm:$0xf]
  %v614 = vld [vmem:[%s596 + $0x44] sm:$0xf]
  %v615 = vld [vmem:[%s596 + $0x48] sm:$0xf]
  %v616 = vld [vmem:[%s596 + $0x4c] sm:$0xf]
  %v617 = vld [vmem:[%s596 + $0x50] sm:$0xf]
  %v618 = vld [vmem:[%s596 + $0x54] sm:$0xf]
  %v619 = vld [vmem:[%s596 + $0x58] sm:$0xf]
  %v620 = vld [vmem:[%s596 + $0x5c] sm:$0xf]
  %v621 = vld [vmem:[%s596 + $0x60] sm:$0xf]
  %v622 = vld [vmem:[%s596 + $0x64] sm:$0xf]
  %v623 = vld [vmem:[%s596 + $0x68] sm:$0xf]
  %v624 = vld [vmem:[%s596 + $0x6c] sm:$0xf]
  %v625 = vld [vmem:[%s596 + $0x70] sm:$0xf]
  %v626 = vld [vmem:[%s596 + $0x74] sm:$0xf]
  %v627 = vld [vmem:[%s596 + $0x78] sm:$0xf]
  %v628 = vld [vmem:[%s596 + $0x7c] sm:$0xf]
  %v661 = vunpack.c.l.b16 %v597
  %v662 = vunpack.c.l.b16 %v598
  %v663 = vunpack.c.l.b16 %v599
  %v664 = vunpack.c.l.b16 %v600
  %v665 = vunpack.c.l.b16 %v601
  %v666 = vunpack.c.l.b16 %v602
  %v667 = vunpack.c.l.b16 %v603
  %v668 = vunpack.c.l.b16 %v604
  %v669 = vunpack.c.l.b16 %v605
  %v670 = vunpack.c.l.b16 %v606
  %v671 = vunpack.c.l.b16 %v607
  %v672 = vunpack.c.l.b16 %v608
  %v673 = vunpack.c.l.b16 %v609
  %v674 = vunpack.c.l.b16 %v610
  %v675 = vunpack.c.l.b16 %v611
  %v676 = vunpack.c.l.b16 %v612
  %v677 = vunpack.c.l.b16 %v613
  %v678 = vunpack.c.l.b16 %v614
  %v679 = vunpack.c.l.b16 %v615
  %v680 = vunpack.c.l.b16 %v616
  %v681 = vunpack.c.l.b16 %v617
  %v682 = vunpack.c.l.b16 %v618
  %v683 = vunpack.c.l.b16 %v619
  %v684 = vunpack.c.l.b16 %v620
  %v685 = vunpack.c.l.b16 %v621
  %v686 = vunpack.c.l.b16 %v622
  %v687 = vunpack.c.l.b16 %v623
  %v688 = vunpack.c.l.b16 %v624
  %v689 = vunpack.c.l.b16 %v625
  %v690 = vunpack.c.l.b16 %v626
  %v691 = vunpack.c.l.b16 %v627
  %v692 = vunpack.c.l.b16 %v628
  %v693 = vpack.c.b16 %v662, %v661
  %v694 = vpack.c.b16 %v664, %v663
  %v695 = vpack.c.b16 %v666, %v665
  %v696 = vpack.c.b16 %v668, %v667
  %v697 = vpack.c.b16 %v670, %v669
  %v698 = vpack.c.b16 %v672, %v671
  %v699 = vpack.c.b16 %v674, %v673
  %v700 = vpack.c.b16 %v676, %v675
  %v701 = vpack.c.b16 %v678, %v677
  %v702 = vpack.c.b16 %v680, %v679
  %v703 = vpack.c.b16 %v682, %v681
  %v704 = vpack.c.b16 %v684, %v683
  %v705 = vpack.c.b16 %v686, %v685
  %v706 = vpack.c.b16 %v688, %v687
  %v707 = vpack.c.b16 %v690, %v689
  %v708 = vpack.c.b16 %v692, %v691
  %725 = vmatprep.subr.bf16.mxu0 0
  %726 = vmatpush1.bf16.msra.mxu0 %v700
  %727 = vmatprep.subr.bf16.mxu0 0
  %728 = vmatpush1.bf16.msra.mxu0 %v699
  %729 = vmatprep.subr.bf16.mxu0 0
  %730 = vmatpush1.bf16.msra.mxu0 %v698
  %731 = vmatprep.subr.bf16.mxu0 0
  %732 = vmatpush1.bf16.msra.mxu0 %v697
  %733 = vmatprep.subr.bf16.mxu0 0
  %734 = vmatpush1.bf16.msra.mxu0 %v696
  %735 = vmatprep.subr.bf16.mxu0 0
  %736 = vmatpush1.bf16.msra.mxu0 %v695
  %737 = vmatprep.subr.bf16.mxu0 0
  %738 = vmatpush1.bf16.msra.mxu0 %v694
  %739 = vmatprep.subr.bf16.mxu0 0
  %740 = vmatpush1.bf16.msra.mxu0 %v693
  %741 = vmatprep.subr.bf16.mxu0 0
  %742 = vmatpush2.bf16.msra.mxu0 %v708
  %743 = vmatprep.subr.bf16.mxu0 0
  %744 = vmatpush2.bf16.msra.mxu0 %v707
  %745 = vmatprep.subr.bf16.mxu0 0
  %746 = vmatpush2.bf16.msra.mxu0 %v706
  %747 = vmatprep.subr.bf16.mxu0 0
  %748 = vmatpush2.bf16.msra.mxu0 %v705
  %749 = vmatprep.subr.bf16.mxu0 0
  %750 = vmatpush2.bf16.msra.mxu0 %v704
  %751 = vmatprep.subr.bf16.mxu0 0
  %752 = vmatpush2.bf16.msra.mxu0 %v703
  %753 = vmatprep.subr.bf16.mxu0 0
  %754 = vmatpush2.bf16.msra.mxu0 %v702
  %755 = vmatprep.subr.bf16.mxu0 0
  %756 = vmatpush2.bf16.msra.mxu0 %v701
  %757 = vmatprep.mubr.bf16.mxu0 %v88
  %758 = vmatmul.mubr.bf16.gmra.mxu0 %v87
  %v759 = vpop.f32.mrf.mxu0
  %v760 = vadd.f32 %v58, %v759
  %v761 = vpop.f32.mrf.mxu0
  %v762 = vpop.f32.mrf.mxu0
  %v763 = vadd.f32 %v63, %v762
  %v764 = vpop.f32.mrf.mxu0
  %765 = vmatprep.mubr.bf16.mxu0 %v90
  %766 = vmatmul.mubr.bf16.gmra.mxu0 %v89
  %v767 = vpop.f32.mrf.mxu0
  %v768 = vadd.f32 %v68, %v767
  %v769 = vpop.f32.mrf.mxu0
  %v770 = vpop.f32.mrf.mxu0
  %v771 = vadd.f32 %v73, %v770
  %v772 = vpop.f32.mrf.mxu0
  %773 = vdwg.mxu0
  %v774 = vmax.f32 %v226, 0.0
  %v775 = vmax.f32 %v229, 0.0
  %v776 = vmax.f32 %v234, 0.0
  %v777 = vmax.f32 %v237, 0.0
  %v778 = vmax.f32 %v404, 0.0
  %v779 = vmax.f32 %v407, 0.0
  %v780 = vmax.f32 %v412, 0.0
  %v781 = vmax.f32 %v415, 0.0
  %v782 = vadd.f32 %v774, %v778
  %v783 = vadd.f32 %v775, %v779
  %v784 = vadd.f32 %v776, %v780
  %v785 = vadd.f32 %v777, %v781
  %v786 = vmax.f32 %v582, 0.0
  %v787 = vmax.f32 %v585, 0.0
  %v788 = vmax.f32 %v590, 0.0
  %v789 = vmax.f32 %v593, 0.0
  %v790 = vadd.f32 %v782, %v786
  %v791 = vadd.f32 %v783, %v787
  %v792 = vadd.f32 %v784, %v788
  %v793 = vadd.f32 %v785, %v789
  %v794 = vmax.f32 %v760, 0.0
  %v795 = vmax.f32 %v763, 0.0
  %v796 = vmax.f32 %v768, 0.0
  %v797 = vmax.f32 %v771, 0.0
  %v798 = vadd.f32 %v790, %v794
  %v799 = vadd.f32 %v791, %v795
  %v800 = vadd.f32 %v792, %v796
  %v801 = vadd.f32 %v793, %v797
  %v802 = vmul.f32 %v798, 0.25
  %v803 = vmul.f32 %v799, 0.25
  %v804 = vmul.f32 %v800, 0.25
  %v805 = vmul.f32 %v801, 0.25
  %v806 = vpack.c.bf16 %v803, %v802
  %v807 = vpack.c.bf16 %v805, %v804
  %v810 = vunpack.c.l.b16 %v806
  %v811 = vunpack.c.h.b16 %v806
  %v812 = vunpack.c.l.b16 %v807
  %v813 = vunpack.c.h.b16 %v807
  %v814 = vpack.c.b16 %v810, %v810
  %v815 = vpack.c.b16 %v811, %v811
  %v816 = vpack.c.b16 %v812, %v812
  %v817 = vpack.c.b16 %v813, %v813
  %822 = vst [vmem:[%s3] sm:$0xf] %v814
  %823 = vst [vmem:[%s3 + $0x4] sm:$0xf] %v815
  %824 = vst [vmem:[%s3 + $0x8] sm:$0xf] %v816
  %825 = vst [vmem:[%s3 + $0xc] sm:$0xf] %v817
  // Predicated region
  $region14: #{double_q_forward.4} parent=0 // pred_check
    _
  $region15: #{double_q_forward.4} parent=0 // pred_check_branch
    %827 = sbr.rel (0) target = $region17
  $region16: #{double_q_forward.4} parent=0 // pred_region
    _
  $region17: #{double_q_forward.4} parent=0 // pred_fallthru
    _
  // Predicated region
  $region18: #{double_q_forward.4} parent=0 // pred_check
    _
  $region19: #{double_q_forward.4} parent=0 // pred_check_branch
    %829 = sbr.rel (0) target = $region21
  $region20: #{double_q_forward.4} parent=0 // pred_region
    _
  $region21: #{double_q_forward.4} parent=0 // pred_fallthru
    _

// kernel: double_q_forward.5
$region0: #{double_q_forward.5}
  #allocation0 [shape = 'u32[]', space=smem, size = 0x4, offset = 0x4, fixed_abs, tag = 'smem constant byte address 0x4 - core index']
  #allocation1 [shape = 'u32[144,128]{1,0:T(1,128)}', space=vmem, size = 0x12000, scoped, tag = 'internal scratch']
  %s0 = inlined_call_operand.vmem [shape: bf16[8,512], index: 0, kind: input, shape index: {}]
  %s1 = inlined_call_operand.vmem [shape: bf16[512,200], index: 1, kind: input, shape index: {}]
  %s2 = inlined_call_operand.vmem [shape: f32[1,200], index: 2, kind: input, shape index: {}]
  %s3 = inlined_call_operand.vmem [shape: bf16[200,200], index: 3, kind: input, shape index: {}]
  %s4 = inlined_call_operand.vmem [shape: f32[1,200], index: 4, kind: input, shape index: {}]
  %s5 = inlined_call_operand.vmem [shape: bf16[200,128], index: 5, kind: input, shape index: {}]
  %s6 = inlined_call_operand.vmem [shape: f32[1,128], index: 6, kind: input, shape index: {}]
  %s7 = inlined_call_operand.vmem [shape: f32[8,128], index: 7, kind: output, shape index: {}]
  %s8 = sld [smem:[#allocation0]]
  $region38: #{double_q_forward.5} parent=0
    _
  %s10 = ssub.s32 1, %s8
  %s11 = scalar_select 0, %s10, %s8
  // Predicated region
  $region2: #{double_q_forward.5} parent=0 // pred_check
    _
  $region3: #{double_q_forward.5} parent=0 // pred_check_branch
    %13 = sbr.rel (0) target = $region5
  $region4: #{double_q_forward.5} parent=0 // pred_region
    _
  $region5: #{double_q_forward.5} parent=0 // pred_fallthru
    _
  // Predicated region
  $region6: #{double_q_forward.5} parent=0 // pred_check
    _
  $region7: #{double_q_forward.5} parent=0 // pred_check_branch
    %15 = sbr.rel (0) target = $region9
  $region8: #{double_q_forward.5} parent=0 // pred_region
    _
  $region9: #{double_q_forward.5} parent=0 // pred_fallthru
    _
  // Predicated region
  $region10: #{double_q_forward.5} parent=0 // pred_check
    _
  $region11: #{double_q_forward.5} parent=0 // pred_check_branch
    %17 = sbr.rel (0) target = $region13
  $region12: #{double_q_forward.5} parent=0 // pred_region
    _
  $region13: #{double_q_forward.5} parent=0 // pred_fallthru
    _
  // Predicated region
  $region14: #{double_q_forward.5} parent=0 // pred_check
    _
  $region15: #{double_q_forward.5} parent=0 // pred_check_branch
    %19 = sbr.rel (0) target = $region17
  $region16: #{double_q_forward.5} parent=0 // pred_region
    _
  $region17: #{double_q_forward.5} parent=0 // pred_fallthru
    _
  // Predicated region
  $region18: #{double_q_forward.5} parent=0 // pred_check
    _
  $region19: #{double_q_forward.5} parent=0 // pred_check_branch
    %21 = sbr.rel (0) target = $region21
  $region20: #{double_q_forward.5} parent=0 // pred_region
    _
  $region21: #{double_q_forward.5} parent=0 // pred_fallthru
    _
  // Predicated region
  $region22: #{double_q_forward.5} parent=0 // pred_check
    _
  $region23: #{double_q_forward.5} parent=0 // pred_check_branch
    %23 = sbr.rel (0) target = $region25
  $region24: #{double_q_forward.5} parent=0 // pred_region
    _
  $region25: #{double_q_forward.5} parent=0 // pred_fallthru
    _
  // Predicated region
  $region26: #{double_q_forward.5} parent=0 // pred_check
    _
  $region27: #{double_q_forward.5} parent=0 // pred_check_branch
    %25 = sbr.rel (0) target = $region29
  $region28: #{double_q_forward.5} parent=0 // pred_region
    _
  $region29: #{double_q_forward.5} parent=0 // pred_fallthru
    _
  %v27 = vld [vmem:[%s0] sm:$0xff]
  %v28 = vld [vmem:[%s0 + $0x8] sm:$0xff]
  %v29 = vld [vmem:[%s1] sm:$0xff]
  %v30 = vld [vmem:[%s1 + $0x8] sm:$0xff]
  %v31 = vld [vmem:[%s1 + $0x10] sm:$0xff]
  %v32 = vld [vmem:[%s1 + $0x18] sm:$0xff]
  %v33 = vld [vmem:[%s1 + $0x20] sm:$0xff]
  %v34 = vld [vmem:[%s1 + $0x28] sm:$0xff]
  %v35 = vld [vmem:[%s1 + $0x30] sm:$0xff]
  %v36 = vld [vmem:[%s1 + $0x38] sm:$0xff]
  %v37 = vld [vmem:[%s1 + $0x40] sm:$0xff]
  %v38 = vld [vmem:[%s1 + $0x48] sm:$0xff]
  %v39 = vld [vmem:[%s1 + $0x50] sm:$0xff]
  %v40 = vld [vmem:[%s1 + $0x58] sm:$0xff]
  %v41 = vld [vmem:[%s1 + $0x60] sm:$0xff]
  %v42 = vld [vmem:[%s1 + $0x68] sm:$0xff]
  %v43 = vld [vmem:[%s1 + $0x70] sm:$0xff]
  %v44 = vld [vmem:[%s1 + $0x78] sm:$0xff]
  %v45 = vld [vmem:[%s1 + $0x80] sm:$0xff]
  %v46 = vld [vmem:[%s1 + $0x88] sm:$0xff]
  %v47 = vld [vmem:[%s1 + $0x90] sm:$0xff]
  %v48 = vld [vmem:[%s1 + $0x98] sm:$0xff]
  %v49 = vld [vmem:[%s1 + $0xa0] sm:$0xff]
  %v50 = vld [vmem:[%s1 + $0xa8] sm:$0xff]
  %v51 = vld [vmem:[%s1 + $0xb0] sm:$0xff]
  %v52 = vld [vmem:[%s1 + $0xb8] sm:$0xff]
  %v53 = vld [vmem:[%s1 + $0xc0] sm:$0xff]
  %v54 = vld [vmem:[%s1 + $0xc8] sm:$0xff]
  %v55 = vld [vmem:[%s1 + $0xd0] sm:$0xff]
  %v56 = vld [vmem:[%s1 + $0xd8] sm:$0xff]
  %v57 = vld [vmem:[%s1 + $0xe0] sm:$0xff]
  %v58 = vld [vmem:[%s1 + $0xe8] sm:$0xff]
  %v59 = vld [vmem:[%s1 + $0xf0] sm:$0xff]
  %v60 = vld [vmem:[%s1 + $0xf8] sm:$0xff]
  %v61 = vld [vmem:[%s1 + $0x100] sm:$0xff]
  %v62 = vld [vmem:[%s1 + $0x108] sm:$0xff]
  %v63 = vld [vmem:[%s1 + $0x110] sm:$0xff]
  %v64 = vld [vmem:[%s1 + $0x118] sm:$0xff]
  %v65 = vld [vmem:[%s1 + $0x120] sm:$0xff]
  %v66 = vld [vmem:[%s1 + $0x128] sm:$0xff]
  %v67 = vld [vmem:[%s1 + $0x130] sm:$0xff]
  %v68 = vld [vmem:[%s1 + $0x138] sm:$0xff]
  %v69 = vld [vmem:[%s1 + $0x140] sm:$0xff]
  %v70 = vld [vmem:[%s1 + $0x148] sm:$0xff]
  %v71 = vld [vmem:[%s1 + $0x150] sm:$0xff]
  %v72 = vld [vmem:[%s1 + $0x158] sm:$0xff]
  %v73 = vld [vmem:[%s1 + $0x160] sm:$0xff]
  %v74 = vld [vmem:[%s1 + $0x168] sm:$0xff]
  %v75 = vld [vmem:[%s1 + $0x170] sm:$0xff]
  %v76 = vld [vmem:[%s1 + $0x178] sm:$0xff]
  %v77 = vld [vmem:[%s1 + $0x180] sm:$0xff]
  %v78 = vld [vmem:[%s1 + $0x188] sm:$0xff]
  %v79 = vld [vmem:[%s1 + $0x190] sm:$0xff]
  %v80 = vld [vmem:[%s1 + $0x198] sm:$0xff]
  %v81 = vld [vmem:[%s1 + $0x1a0] sm:$0xff]
  %v82 = vld [vmem:[%s1 + $0x1a8] sm:$0xff]
  %v83 = vld [vmem:[%s1 + $0x1b0] sm:$0xff]
  %v84 = vld [vmem:[%s1 + $0x1b8] sm:$0xff]
  %v85 = vld [vmem:[%s1 + $0x1c0] sm:$0xff]
  %v86 = vld [vmem:[%s1 + $0x1c8] sm:$0xff]
  %v87 = vld [vmem:[%s1 + $0x1d0] sm:$0xff]
  %v88 = vld [vmem:[%s1 + $0x1d8] sm:$0xff]
  %v89 = vld [vmem:[%s1 + $0x1e0] sm:$0xff]
  %v90 = vld [vmem:[%s1 + $0x1e8] sm:$0xff]
  %v91 = vld [vmem:[%s1 + $0x1f0] sm:$0xff]
  %v92 = vld [vmem:[%s1 + $0x1f8] sm:$0xff]
  %v93 = vld [vmem:[%s2] sm:$0x3]
  %v95 = vlaneseq
  %v96 = vshrl.u32 %v95, 7
  %v97 = vsub.s32 0, %v96
  %v98 = vrot.slane %v93, %v97
  %v99 = vlaneseq
  %v100 = vshrl.u32 %v99, 7
  %v101 = vsub.s32 1, %v100
  %v102 = vrot.slane %v93, %v101
  %v107 = vunpack.c.l.b16 %v27
  %v108 = vunpack.c.h.b16 %v27
  %v109 = vunpack.c.l.b16 %v28
  %v110 = vunpack.c.h.b16 %v28
  %v111 = vpack.c.b16 %v107, %v107
  %v112 = vpack.c.b16 %v108, %v108
  %v113 = vpack.c.b16 %v109, %v109
  %v114 = vpack.c.b16 %v110, %v110
  %v183 = vunpack.c.l.b16 %v29
  %v184 = vunpack.c.h.b16 %v29
  %v185 = vunpack.c.l.b16 %v30
  %v186 = vunpack.c.h.b16 %v30
  %v187 = vunpack.c.l.b16 %v31
  %v188 = vunpack.c.h.b16 %v31
  %v189 = vunpack.c.l.b16 %v32
  %v190 = vunpack.c.h.b16 %v32
  %v191 = vunpack.c.l.b16 %v33
  %v192 = vunpack.c.h.b16 %v33
  %v193 = vunpack.c.l.b16 %v34
  %v194 = vunpack.c.h.b16 %v34
  %v195 = vunpack.c.l.b16 %v35
  %v196 = vunpack.c.h.b16 %v35
  %v197 = vunpack.c.l.b16 %v36
  %v198 = vunpack.c.h.b16 %v36
  %v199 = vunpack.c.l.b16 %v37
  %v200 = vunpack.c.h.b16 %v37
  %v201 = vunpack.c.l.b16 %v38
  %v202 = vunpack.c.h.b16 %v38
  %v203 = vunpack.c.l.b16 %v39
  %v204 = vunpack.c.h.b16 %v39
  %v205 = vunpack.c.l.b16 %v40
  %v206 = vunpack.c.h.b16 %v40
  %v207 = vunpack.c.l.b16 %v41
  %v208 = vunpack.c.h.b16 %v41
  %v209 = vunpack.c.l.b16 %v42
  %v210 = vunpack.c.h.b16 %v42
  %v211 = vunpack.c.l.b16 %v43
  %v212 = vunpack.c.h.b16 %v43
  %v213 = vunpack.c.l.b16 %v44
  %v214 = vunpack.c.h.b16 %v44
  %v215 = vunpack.c.l.b16 %v45
  %v216 = vunpack.c.h.b16 %v45
  %v217 = vunpack.c.l.b16 %v46
  %v218 = vunpack.c.h.b16 %v46
  %v219 = vunpack.c.l.b16 %v47
  %v220 = vunpack.c.h.b16 %v47
  %v221 = vunpack.c.l.b16 %v48
  %v222 = vunpack.c.h.b16 %v48
  %v223 = vunpack.c.l.b16 %v49
  %v224 = vunpack.c.h.b16 %v49
  %v225 = vunpack.c.l.b16 %v50
  %v226 = vunpack.c.h.b16 %v50
  %v227 = vunpack.c.l.b16 %v51
  %v228 = vunpack.c.h.b16 %v51
  %v229 = vunpack.c.l.b16 %v52
  %v230 = vunpack.c.h.b16 %v52
  %v231 = vunpack.c.l.b16 %v53
  %v232 = vunpack.c.h.b16 %v53
  %v233 = vunpack.c.l.b16 %v54
  %v234 = vunpack.c.h.b16 %v54
  %v235 = vunpack.c.l.b16 %v55
  %v236 = vunpack.c.h.b16 %v55
  %v237 = vunpack.c.l.b16 %v56
  %v238 = vunpack.c.h.b16 %v56
  %v239 = vunpack.c.l.b16 %v57
  %v240 = vunpack.c.h.b16 %v57
  %v241 = vunpack.c.l.b16 %v58
  %v242 = vunpack.c.h.b16 %v58
  %v243 = vunpack.c.l.b16 %v59
  %v244 = vunpack.c.h.b16 %v59
  %v245 = vunpack.c.l.b16 %v60
  %v246 = vunpack.c.h.b16 %v60
  %v247 = vunpack.c.l.b16 %v61
  %v248 = vunpack.c.h.b16 %v61
  %v249 = vunpack.c.l.b16 %v62
  %v250 = vunpack.c.h.b16 %v62
  %v251 = vunpack.c.l.b16 %v63
  %v252 = vunpack.c.h.b16 %v63
  %v253 = vunpack.c.l.b16 %v64
  %v254 = vunpack.c.h.b16 %v64
  %v255 = vunpack.c.l.b16 %v65
  %v256 = vunpack.c.h.b16 %v65
  %v257 = vunpack.c.l.b16 %v66
  %v258 = vunpack.c.h.b16 %v66
  %v259 = vunpack.c.l.b16 %v67
  %v260 = vunpack.c.h.b16 %v67
  %v261 = vunpack.c.l.b16 %v68
  %v262 = vunpack.c.h.b16 %v68
  %v263 = vunpack.c.l.b16 %v69
  %v264 = vunpack.c.h.b16 %v69
  %v265 = vunpack.c.l.b16 %v70
  %v266 = vunpack.c.h.b16 %v70
  %v267 = vunpack.c.l.b16 %v71
  %v268 = vunpack.c.h.b16 %v71
  %v269 = vunpack.c.l.b16 %v72
  %v270 = vunpack.c.h.b16 %v72
  %v271 = vunpack.c.l.b16 %v73
  %v272 = vunpack.c.h.b16 %v73
  %v273 = vunpack.c.l.b16 %v74
  %v274 = vunpack.c.h.b16 %v74
  %v275 = vunpack.c.l.b16 %v75
  %v276 = vunpack.c.h.b16 %v75
  %v277 = vunpack.c.l.b16 %v76
  %v278 = vunpack.c.h.b16 %v76
  %v279 = vunpack.c.l.b16 %v77
  %v280 = vunpack.c.h.b16 %v77
  %v281 = vunpack.c.l.b16 %v78
  %v282 = vunpack.c.h.b16 %v78
  %v283 = vunpack.c.l.b16 %v79
  %v284 = vunpack.c.h.b16 %v79
  %v285 = vunpack.c.l.b16 %v80
  %v286 = vunpack.c.h.b16 %v80
  %v287 = vunpack.c.l.b16 %v81
  %v288 = vunpack.c.h.b16 %v81
  %v289 = vunpack.c.l.b16 %v82
  %v290 = vunpack.c.h.b16 %v82
  %v291 = vunpack.c.l.b16 %v83
  %v292 = vunpack.c.h.b16 %v83
  %v293 = vunpack.c.l.b16 %v84
  %v294 = vunpack.c.h.b16 %v84
  %v295 = vunpack.c.l.b16 %v85
  %v296 = vunpack.c.h.b16 %v85
  %v297 = vunpack.c.l.b16 %v86
  %v298 = vunpack.c.h.b16 %v86
  %v299 = vunpack.c.l.b16 %v87
  %v300 = vunpack.c.h.b16 %v87
  %v301 = vunpack.c.l.b16 %v88
  %v302 = vunpack.c.h.b16 %v88
  %v303 = vunpack.c.l.b16 %v89
  %v304 = vunpack.c.h.b16 %v89
  %v305 = vunpack.c.l.b16 %v90
  %v306 = vunpack.c.h.b16 %v90
  %v307 = vunpack.c.l.b16 %v91
  %v308 = vunpack.c.h.b16 %v91
  %v309 = vunpack.c.l.b16 %v92
  %v310 = vunpack.c.h.b16 %v92
  %v311 = vpack.c.b16 %v185, %v183
  %v312 = vpack.c.b16 %v186, %v184
  %v313 = vpack.c.b16 %v189, %v187
  %v314 = vpack.c.b16 %v190, %v188
  %v315 = vpack.c.b16 %v193, %v191
  %v316 = vpack.c.b16 %v194, %v192
  %v317 = vpack.c.b16 %v197, %v195
  %v318 = vpack.c.b16 %v198, %v196
  %v319 = vpack.c.b16 %v201, %v199
  %v320 = vpack.c.b16 %v202, %v200
  %v321 = vpack.c.b16 %v205, %v203
  %v322 = vpack.c.b16 %v206, %v204
  %v323 = vpack.c.b16 %v209, %v207
  %v324 = vpack.c.b16 %v210, %v208
  %v325 = vpack.c.b16 %v213, %v211
  %v326 = vpack.c.b16 %v214, %v212
  %v327 = vpack.c.b16 %v217, %v215
  %v328 = vpack.c.b16 %v218, %v216
  %v329 = vpack.c.b16 %v221, %v219
  %v330 = vpack.c.b16 %v222, %v220
  %v331 = vpack.c.b16 %v225, %v223
  %v332 = vpack.c.b16 %v226, %v224
  %v333 = vpack.c.b16 %v229, %v227
  %v334 = vpack.c.b16 %v230, %v228
  %v335 = vpack.c.b16 %v233, %v231
  %v336 = vpack.c.b16 %v234, %v232
  %v337 = vpack.c.b16 %v237, %v235
  %v338 = vpack.c.b16 %v238, %v236
  %v339 = vpack.c.b16 %v241, %v239
  %v340 = vpack.c.b16 %v242, %v240
  %v341 = vpack.c.b16 %v245, %v243
  %v342 = vpack.c.b16 %v246, %v244
  %v343 = vpack.c.b16 %v249, %v247
  %v344 = vpack.c.b16 %v250, %v248
  %v345 = vpack.c.b16 %v253, %v251
  %v346 = vpack.c.b16 %v254, %v252
  %v347 = vpack.c.b16 %v257, %v255
  %v348 = vpack.c.b16 %v258, %v256
  %v349 = vpack.c.b16 %v261, %v259
  %v350 = vpack.c.b16 %v262, %v260
  %v351 = vpack.c.b16 %v265, %v263
  %v352 = vpack.c.b16 %v266, %v264
  %v353 = vpack.c.b16 %v269, %v267
  %v354 = vpack.c.b16 %v270, %v268
  %v355 = vpack.c.b16 %v273, %v271
  %v356 = vpack.c.b16 %v274, %v272
  %v357 = vpack.c.b16 %v277, %v275
  %v358 = vpack.c.b16 %v278, %v276
  %v359 = vpack.c.b16 %v281, %v279
  %v360 = vpack.c.b16 %v282, %v280
  %v361 = vpack.c.b16 %v285, %v283
  %v362 = vpack.c.b16 %v286, %v284
  %v363 = vpack.c.b16 %v289, %v287
  %v364 = vpack.c.b16 %v290, %v288
  %v365 = vpack.c.b16 %v293, %v291
  %v366 = vpack.c.b16 %v294, %v292
  %v367 = vpack.c.b16 %v297, %v295
  %v368 = vpack.c.b16 %v298, %v296
  %v369 = vpack.c.b16 %v301, %v299
  %v370 = vpack.c.b16 %v302, %v300
  %v371 = vpack.c.b16 %v305, %v303
  %v372 = vpack.c.b16 %v306, %v304
  %v373 = vpack.c.b16 %v309, %v307
  %v374 = vpack.c.b16 %v310, %v308
  %439 = vmatprep.subr.bf16.mxu0 %v326
  %440 = vmatpush1.bf16.msra.mxu0 %v325
  %441 = vmatprep.subr.bf16.mxu0 %v324
  %442 = vmatpush1.bf16.msra.mxu0 %v323
  %443 = vmatprep.subr.bf16.mxu0 %v322
  %444 = vmatpush1.bf16.msra.mxu0 %v321
  %445 = vmatprep.subr.bf16.mxu0 %v320
  %446 = vmatpush1.bf16.msra.mxu0 %v319
  %447 = vmatprep.subr.bf16.mxu0 %v318
  %448 = vmatpush1.bf16.msra.mxu0 %v317
  %449 = vmatprep.subr.bf16.mxu0 %v316
  %450 = vmatpush1.bf16.msra.mxu0 %v315
  %451 = vmatprep.subr.bf16.mxu0 %v314
  %452 = vmatpush1.bf16.msra.mxu0 %v313
  %453 = vmatprep.subr.bf16.mxu0 %v312
  %454 = vmatpush1.bf16.msra.mxu0 %v311
  %455 = vmatprep.subr.bf16.mxu0 %v342
  %456 = vmatpush2.bf16.msra.mxu0 %v341
  %457 = vmatprep.subr.bf16.mxu0 %v340
  %458 = vmatpush2.bf16.msra.mxu0 %v339
  %459 = vmatprep.subr.bf16.mxu0 %v338
  %460 = vmatpush2.bf16.msra.mxu0 %v337
  %461 = vmatprep.subr.bf16.mxu0 %v336
  %462 = vmatpush2.bf16.msra.mxu0 %v335
  %463 = vmatprep.subr.bf16.mxu0 %v334
  %464 = vmatpush2.bf16.msra.mxu0 %v333
  %465 = vmatprep.subr.bf16.mxu0 %v332
  %466 = vmatpush2.bf16.msra.mxu0 %v331
  %467 = vmatprep.subr.bf16.mxu0 %v330
  %468 = vmatpush2.bf16.msra.mxu0 %v329
  %469 = vmatprep.subr.bf16.mxu0 %v328
  %470 = vmatpush2.bf16.msra.mxu0 %v327
  %471 = vmatprep.mubr.bf16.mxu0 %v112
  %472 = vmatmul.mubr.bf16.gmra.mxu0 %v111
  %v473 = vpop.f32.mrf.mxu0
  %v474 = vadd.f32 %v98, %v473
  %v475 = vpop.f32.mrf.mxu0
  %v476 = vadd.f32 %v102, %v475
  %v477 = vpop.f32.mrf.mxu0
  %v478 = vpop.f32.mrf.mxu0
  %479 = vdwg.mxu0
  %480 = vmatprep.subr.bf16.mxu0 %v358
  %481 = vmatpush1.bf16.msra.mxu0 %v357
  %482 = vmatprep.subr.bf16.mxu0 %v356
  %483 = vmatpush1.bf16.msra.mxu0 %v355
  %484 = vmatprep.subr.bf16.mxu0 %v354
  %485 = vmatpush1.bf16.msra.mxu0 %v353
  %486 = vmatprep.subr.bf16.mxu0 %v352
  %487 = vmatpush1.bf16.msra.mxu0 %v351
  %488 = vmatprep.subr.bf16.mxu0 %v350
  %489 = vmatpush1.bf16.msra.mxu0 %v349
  %490 = vmatprep.subr.bf16.mxu0 %v348
  %491 = vmatpush1.bf16.msra.mxu0 %v347
  %492 = vmatprep.subr.bf16.mxu0 %v346
  %493 = vmatpush1.bf16.msra.mxu0 %v345
  %494 = vmatprep.subr.bf16.mxu0 %v344
  %495 = vmatpush1.bf16.msra.mxu0 %v343
  %496 = vmatprep.subr.bf16.mxu0 %v374
  %497 = vmatpush2.bf16.msra.mxu0 %v373
  %498 = vmatprep.subr.bf16.mxu0 %v372
  %499 = vmatpush2.bf16.msra.mxu0 %v371
  %500 = vmatprep.subr.bf16.mxu0 %v370
  %501 = vmatpush2.bf16.msra.mxu0 %v369
  %502 = vmatprep.subr.bf16.mxu0 %v368
  %503 = vmatpush2.bf16.msra.mxu0 %v367
  %504 = vmatprep.subr.bf16.mxu0 %v366
  %505 = vmatpush2.bf16.msra.mxu0 %v365
  %506 = vmatprep.subr.bf16.mxu0 %v364
  %507 = vmatpush2.bf16.msra.mxu0 %v363
  %508 = vmatprep.subr.bf16.mxu0 %v362
  %509 = vmatpush2.bf16.msra.mxu0 %v361
  %510 = vmatprep.subr.bf16.mxu0 %v360
  %511 = vmatpush2.bf16.msra.mxu0 %v359
  %512 = vmatprep.mubr.bf16.mxu0 %v114
  %513 = vmatmul.mubr.bf16.gmra.mxu0 %v113
  %v514 = vpop.f32.mrf.mxu0
  %v515 = vadd.f32 %v474, %v514
  %v516 = vpop.f32.mrf.mxu0
  %v517 = vadd.f32 %v476, %v516
  %v518 = vpop.f32.mrf.mxu0
  %v519 = vpop.f32.mrf.mxu0
  %520 = vdwg.mxu0
  %v521 = vmax.f32 %v515, 0.0
  %v522 = vmax.f32 %v517, 0.0
  %v523 = vpack.c.bf16 %v521, %v521
  %v524 = vpack.c.bf16 %v522, %v522
  %v525 = vld [vmem:[%s3] sm:$0xff]
  %v526 = vld [vmem:[%s3 + $0x8] sm:$0xff]
  %v527 = vld [vmem:[%s3 + $0x10] sm:$0xff]
  %v528 = vld [vmem:[%s3 + $0x18] sm:$0xff]
  %v529 = vld [vmem:[%s3 + $0x20] sm:$0xff]
  %v530 = vld [vmem:[%s3 + $0x28] sm:$0xff]
  %v531 = vld [vmem:[%s3 + $0x30] sm:$0xff]
  %v532 = vld [vmem:[%s3 + $0x38] sm:$0xff]
  %v533 = vld [vmem:[%s3 + $0x40] sm:$0xff]
  %v534 = vld [vmem:[%s3 + $0x48] sm:$0xff]
  %v535 = vld [vmem:[%s3 + $0x50] sm:$0xff]
  %v536 = vld [vmem:[%s3 + $0x58] sm:$0xff]
  %v537 = vld [vmem:[%s3 + $0x60] sm:$0xff]
  %v538 = vld [vmem:[%s3 + $0x68] sm:$0xff]
  %v539 = vld [vmem:[%s3 + $0x70] sm:$0xff]
  %v540 = vld [vmem:[%s3 + $0x78] sm:$0xff]
  %v541 = vld [vmem:[%s3 + $0x80] sm:$0xff]
  %v542 = vld [vmem:[%s3 + $0x88] sm:$0xff]
  %v543 = vld [vmem:[%s3 + $0x90] sm:$0xff]
  %v544 = vld [vmem:[%s3 + $0x98] sm:$0xff]
  %v545 = vld [vmem:[%s3 + $0xa0] sm:$0xff]
  %v546 = vld [vmem:[%s3 + $0xa8] sm:$0xff]
  %v547 = vld [vmem:[%s3 + $0xb0] sm:$0xff]
  %v548 = vld [vmem:[%s3 + $0xb8] sm:$0xff]
  %v549 = vld [vmem:[%s3 + $0xc0] sm:$0xff]
  %v550 = vld [vmem:[%s4] sm:$0x3]
  %v552 = vlaneseq
  %v553 = vshrl.u32 %v552, 7
  %v554 = vsub.s32 0, %v553
  %v555 = vrot.slane %v550, %v554
  %v556 = vlaneseq
  %v557 = vshrl.u32 %v556, 7
  %v558 = vsub.s32 1, %v557
  %v559 = vrot.slane %v550, %v558
  %v587 = vunpack.c.l.b16 %v525
  %v588 = vunpack.c.h.b16 %v525
  %v589 = vunpack.c.l.b16 %v526
  %v590 = vunpack.c.h.b16 %v526
  %v591 = vunpack.c.l.b16 %v527
  %v592 = vunpack.c.h.b16 %v527
  %v593 = vunpack.c.l.b16 %v528
  %v594 = vunpack.c.h.b16 %v528
  %v595 = vunpack.c.l.b16 %v529
  %v596 = vunpack.c.h.b16 %v529
  %v597 = vunpack.c.l.b16 %v530
  %v598 = vunpack.c.h.b16 %v530
  %v599 = vunpack.c.l.b16 %v531
  %v600 = vunpack.c.h.b16 %v531
  %v601 = vunpack.c.l.b16 %v532
  %v602 = vunpack.c.h.b16 %v532
  %v603 = vunpack.c.l.b16 %v533
  %v604 = vunpack.c.h.b16 %v533
  %v605 = vunpack.c.l.b16 %v534
  %v606 = vunpack.c.h.b16 %v534
  %v607 = vunpack.c.l.b16 %v535
  %v608 = vunpack.c.h.b16 %v535
  %v609 = vunpack.c.l.b16 %v536
  %v610 = vunpack.c.h.b16 %v536
  %v611 = vunpack.c.l.b16 %v537
  %v612 = vunpack.c.h.b16 %v537
  %v613 = vunpack.c.l.b16 %v538
  %v614 = vunpack.c.h.b16 %v538
  %v615 = vunpack.c.l.b16 %v539
  %v616 = vunpack.c.h.b16 %v539
  %v617 = vunpack.c.l.b16 %v540
  %v618 = vunpack.c.h.b16 %v540
  %v619 = vunpack.c.l.b16 %v541
  %v620 = vunpack.c.h.b16 %v541
  %v621 = vunpack.c.l.b16 %v542
  %v622 = vunpack.c.h.b16 %v542
  %v623 = vunpack.c.l.b16 %v543
  %v624 = vunpack.c.h.b16 %v543
  %v625 = vunpack.c.l.b16 %v544
  %v626 = vunpack.c.h.b16 %v544
  %v627 = vunpack.c.l.b16 %v545
  %v628 = vunpack.c.h.b16 %v545
  %v629 = vunpack.c.l.b16 %v546
  %v630 = vunpack.c.h.b16 %v546
  %v631 = vunpack.c.l.b16 %v547
  %v632 = vunpack.c.h.b16 %v547
  %v633 = vunpack.c.l.b16 %v548
  %v634 = vunpack.c.h.b16 %v548
  %v635 = vunpack.c.l.b16 %v549
  %v636 = vunpack.c.h.b16 %v549
  %v637 = vpack.c.b16 %v589, %v587
  %v638 = vpack.c.b16 %v590, %v588
  %v639 = vpack.c.b16 %v593, %v591
  %v640 = vpack.c.b16 %v594, %v592
  %v641 = vpack.c.b16 %v597, %v595
  %v642 = vpack.c.b16 %v598, %v596
  %v643 = vpack.c.b16 %v601, %v599
  %v644 = vpack.c.b16 %v602, %v600
  %v645 = vpack.c.b16 %v605, %v603
  %v646 = vpack.c.b16 %v606, %v604
  %v647 = vpack.c.b16 %v609, %v607
  %v648 = vpack.c.b16 %v610, %v608
  %v649 = vpack.c.b16 %v613, %v611
  %v650 = vpack.c.b16 %v614, %v612
  %v651 = vpack.c.b16 %v617, %v615
  %v652 = vpack.c.b16 %v618, %v616
  %v653 = vpack.c.b16 %v621, %v619
  %v654 = vpack.c.b16 %v622, %v620
  %v655 = vpack.c.b16 %v625, %v623
  %v656 = vpack.c.b16 %v626, %v624
  %v657 = vpack.c.b16 %v629, %v627
  %v658 = vpack.c.b16 %v630, %v628
  %v659 = vpack.c.b16 %v633, %v631
  %v660 = vpack.c.b16 %v634, %v632
  %v661 = vpack.c.b16 %v635, %v635
  %v662 = vpack.c.b16 %v636, %v636
  %vm687 = vcmask 588800
  %v689 = vsel %vm687, %v524, 0
  %vm691 = vcmask 1043456
  %v693 = vsel %vm691, %v661, 0
  %v696 = vsel %vm691, %v662, 0
  %698 = vmatprep.subr.bf16.mxu0 %v652
  %699 = vmatpush1.bf16.msra.mxu0 %v651
  %700 = vmatprep.subr.bf16.mxu0 %v650
  %701 = vmatpush1.bf16.msra.mxu0 %v649
  %702 = vmatprep.subr.bf16.mxu0 %v648
  %703 = vmatpush1.bf16.msra.mxu0 %v647
  %704 = vmatprep.subr.bf16.mxu0 %v646
  %705 = vmatpush1.bf16.msra.mxu0 %v645
  %706 = vmatprep.subr.bf16.mxu0 %v644
  %707 = vmatpush1.bf16.msra.mxu0 %v643
  %708 = vmatprep.subr.bf16.mxu0 %v642
  %709 = vmatpush1.bf16.msra.mxu0 %v641
  %710 = vmatprep.subr.bf16.mxu0 %v640
  %711 = vmatpush1.bf16.msra.mxu0 %v639
  %712 = vmatprep.subr.bf16.mxu0 %v638
  %713 = vmatpush1.bf16.msra.mxu0 %v637
  %714 = vmatprep.subr.bf16.mxu0 0
  %715 = vmatpush2.bf16.msra.mxu0 0
  %716 = vmatprep.subr.bf16.mxu0 0
  %717 = vmatpush2.bf16.msra.mxu0 0
  %718 = vmatprep.subr.bf16.mxu0 0
  %719 = vmatpush2.bf16.msra.mxu0 0
  %720 = vmatprep.subr.bf16.mxu0 %v696
  %721 = vmatpush2.bf16.msra.mxu0 %v693
  %722 = vmatprep.subr.bf16.mxu0 %v660
  %723 = vmatpush2.bf16.msra.mxu0 %v659
  %724 = vmatprep.subr.bf16.mxu0 %v658
  %725 = vmatpush2.bf16.msra.mxu0 %v657
  %726 = vmatprep.subr.bf16.mxu0 %v656
  %727 = vmatpush2.bf16.msra.mxu0 %v655
  %728 = vmatprep.subr.bf16.mxu0 %v654
  %729 = vmatpush2.bf16.msra.mxu0 %v653
  %730 = vmatprep.mubr.bf16.mxu0 %v689
  %731 = vmatmul.mubr.bf16.gmra.mxu0 %v523
  %v732 = vpop.f32.mrf.mxu0
  %v733 = vadd.f32 %v555, %v732
  %v734 = vpop.f32.mrf.mxu0
  %v735 = vadd.f32 %v559, %v734
  %v736 = vpop.f32.mrf.mxu0
  %v737 = vpop.f32.mrf.mxu0
  %738 = vdwg.mxu0
  %v739 = vmax.f32 %v733, 0.0
  %v740 = vmax.f32 %v735, 0.0
  %v741 = vpack.c.bf16 %v739, %v739
  %v742 = vpack.c.bf16 %v740, %v740
  %v743 = vld [vmem:[%s5] sm:$0xf]
  %v744 = vld [vmem:[%s5 + $0x4] sm:$0xf]
  %v745 = vld [vmem:[%s5 + $0x8] sm:$0xf]
  %v746 = vld [vmem:[%s5 + $0xc] sm:$0xf]
  %v747 = vld [vmem:[%s5 + $0x10] sm:$0xf]
  %v748 = vld [vmem:[%s5 + $0x14] sm:$0xf]
  %v749 = vld [vmem:[%s5 + $0x18] sm:$0xf]
  %v750 = vld [vmem:[%s5 + $0x1c] sm:$0xf]
  %v751 = vld [vmem:[%s5 + $0x20] sm:$0xf]
  %v752 = vld [vmem:[%s5 + $0x24] sm:$0xf]
  %v753 = vld [vmem:[%s5 + $0x28] sm:$0xf]
  %v754 = vld [vmem:[%s5 + $0x2c] sm:$0xf]
  %v755 = vld [vmem:[%s5 + $0x30] sm:$0xf]
  %v756 = vld [vmem:[%s5 + $0x34] sm:$0xf]
  %v757 = vld [vmem:[%s5 + $0x38] sm:$0xf]
  %v758 = vld [vmem:[%s5 + $0x3c] sm:$0xf]
  %v759 = vld [vmem:[%s5 + $0x40] sm:$0xf]
  %v760 = vld [vmem:[%s5 + $0x44] sm:$0xf]
  %v761 = vld [vmem:[%s5 + $0x48] sm:$0xf]
  %v762 = vld [vmem:[%s5 + $0x4c] sm:$0xf]
  %v763 = vld [vmem:[%s5 + $0x50] sm:$0xf]
  %v764 = vld [vmem:[%s5 + $0x54] sm:$0xf]
  %v765 = vld [vmem:[%s5 + $0x58] sm:$0xf]
  %v766 = vld [vmem:[%s5 + $0x5c] sm:$0xf]
  %v767 = vld [vmem:[%s5 + $0x60] sm:$0xf]
  %v768 = vld [vmem:[%s6] sm:$0x1]
  %v770 = vlaneseq
  %v771 = vshrl.u32 %v770, 7
  %v772 = vsub.s32 0, %v771
  %v773 = vrot.slane %v768, %v772
  %v800 = vunpack.c.l.b16 %v743
  %v801 = vunpack.c.l.b16 %v744
  %v802 = vunpack.c.l.b16 %v745
  %v803 = vunpack.c.l.b16 %v746
  %v804 = vunpack.c.l.b16 %v747
  %v805 = vunpack.c.l.b16 %v748
  %v806 = vunpack.c.l.b16 %v749
  %v807 = vunpack.c.l.b16 %v750
  %v808 = vunpack.c.l.b16 %v751
  %v809 = vunpack.c.l.b16 %v752
  %v810 = vunpack.c.l.b16 %v753
  %v811 = vunpack.c.l.b16 %v754
  %v812 = vunpack.c.l.b16 %v755
  %v813 = vunpack.c.l.b16 %v756
  %v814 = vunpack.c.l.b16 %v757
  %v815 = vunpack.c.l.b16 %v758
  %v816 = vunpack.c.l.b16 %v759
  %v817 = vunpack.c.l.b16 %v760
  %v818 = vunpack.c.l.b16 %v761
  %v819 = vunpack.c.l.b16 %v762
  %v820 = vunpack.c.l.b16 %v763
  %v821 = vunpack.c.l.b16 %v764
  %v822 = vunpack.c.l.b16 %v765
  %v823 = vunpack.c.l.b16 %v766
  %v824 = vunpack.c.l.b16 %v767
  %v825 = vpack.c.b16 %v801, %v800
  %v826 = vpack.c.b16 %v803, %v802
  %v827 = vpack.c.b16 %v805, %v804
  %v828 = vpack.c.b16 %v807, %v806
  %v829 = vpack.c.b16 %v809, %v808
  %v830 = vpack.c.b16 %v811, %v810
  %v831 = vpack.c.b16 %v813, %v812
  %v832 = vpack.c.b16 %v815, %v814
  %v833 = vpack.c.b16 %v817, %v816
  %v834 = vpack.c.b16 %v819, %v818
  %v835 = vpack.c.b16 %v821, %v820
  %v836 = vpack.c.b16 %v823, %v822
  %v837 = vpack.c.b16 %v824, %v824
  %v851 = vsel %vm687, %v742, 0
  %v854 = vsel %vm691, %v837, 0
  %856 = vmatprep.subr.bf16.mxu0 0
  %857 = vmatpush1.bf16.msra.mxu0 %v832
  %858 = vmatprep.subr.bf16.mxu0 0
  %859 = vmatpush1.bf16.msra.mxu0 %v831
  %860 = vmatprep.subr.bf16.mxu0 0
  %861 = vmatpush1.bf16.msra.mxu0 %v830
  %862 = vmatprep.subr.bf16.mxu0 0
  %863 = vmatpush1.bf16.msra.mxu0 %v829
  %864 = vmatprep.subr.bf16.mxu0 0
  %865 = vmatpush1.bf16.msra.mxu0 %v828
  %866 = vmatprep.subr.bf16.mxu0 0
  %867 = vmatpush1.bf16.msra.mxu0 %v827
  %868 = vmatprep.subr.bf16.mxu0 0
  %869 = vmatpush1.bf16.msra.mxu0 %v826
  %870 = vmatprep.subr.bf16.mxu0 0
  %871 = vmatpush1.bf16.msra.mxu0 %v825
  %872 = vmatprep.subr.bf16.mxu0 0
  %873 = vmatpush2.bf16.msra.mxu0 0
  %874 = vmatprep.subr.bf16.mxu0 0
  %875 = vmatpush2.bf16.msra.mxu0 0
  %876 = vmatprep.subr.bf16.mxu0 0
  %877 = vmatpush2.bf16.msra.mxu0 0
  %878 = vmatprep.subr.bf16.mxu0 0
  %879 = vmatpush2.bf16.msra.mxu0 %v854
  %880 = vmatprep.subr.bf16.mxu0 0
  %881 = vmatpush2.bf16.msra.mxu0 %v836
  %882 = vmatprep.subr.bf16.mxu0 0
  %883 = vmatpush2.bf16.msra.mxu0 %v835
  %884 = vmatprep.subr.bf16.mxu0 0
  %885 = vmatpush2.bf16.msra.mxu0 %v834
  %886 = vmatprep.subr.bf16.mxu0 0
  %887 = vmatpush2.bf16.msra.mxu0 %v833
  %888 = vmatprep.mubr.bf16.mxu0 %v851
  %889 = vmatmul.mubr.bf16.gmra.mxu0 %v741
  %v890 = vpop.f32.mrf.mxu0
  %v891 = vadd.f32 %v773, %v890
  %v892 = vpop.f32.mrf.mxu0
  %v893 = vpop.f32.mrf.mxu0
  %v894 = vpop.f32.mrf.mxu0
  %895 = vdwg.mxu0
  %896 = vst [vmem:[%s7] sm:$0xff] %v891
  // Predicated region
  $region30: #{double_q_forward.5} parent=0 // pred_check
    _
  $region31: #{double_q_forward.5} parent=0 // pred_check_branch
    %898 = sbr.rel (0) target = $region33
  $region32: #{double_q_forward.5} parent=0 // pred_region
    _
  $region33: #{double_q_forward.5} parent=0 // pred_fallthru
    _
  // Predicated region
  $region34: #{double_q_forward.5} parent=0 // pred_check
    _
  $region35: #{double_q_forward.5} parent=0 // pred_check_branch
    %900 = sbr.rel (0) target = $region37
  $region36: #{double_q_forward.5} parent=0 // pred_region
    _
  $region37: #{double_q_forward.5} parent=0 // pred_fallthru
    _

</llo_original>
